<compile_context>
chip_gen: v6e
topology: v6e:2x2x1
jax: 0.10.0
libtpu: 0.0.40
codegen_flags: <defaults>
</compile_context>

<pallas_src>
import functools

import jax
import jax.numpy as jnp
from jax.experimental import pallas as pl
from jax.experimental.pallas import tpu as pltpu

NEG_SLOPE = 0.01          # nn.LeakyReLU() default negative_slope
LATENT = 100              # true latent width
LATENT_PAD = 128          # sublane-padded latent width
HEADS = 2 * LATENT_PAD    # fused mu|logvar head width


def _leaky_relu(v):
    return jnp.where(v > 0, v, NEG_SLOPE * v)


def _dot(w_bf16, a_f32):
    # bf16 x bf16 MXU matmul with f32 accumulation.  Weights are stored bf16;
    # activations are cast only at the MXU boundary (element-wise math stays
    # f32 -- the v5e-safe choice).
    return jnp.dot(w_bf16, a_f32.astype(jnp.bfloat16),
                   preferred_element_type=jnp.float32)


def vae_kernel(x_ref, eps_ref,
               w_e0_ref, b_e0_ref,      # enc_fc0 : 1   -> 10   (VPU outer product)
               w_e1_ref, b_e1_ref,      # enc_fc1 : 10  -> 50   (MXU)
               w_h_ref, b_h_ref,        # enc_fc11|enc_fc12 fused: 50 -> 256 (MXU)
               w_d_ref, b_d_ref,        # dec_fc  : 128 -> 200  (MXU, cols padded)
               w_d0_ref, b_d0_ref,      # dec_fc0 : 200 -> 100  (MXU)
               w_d1_ref, b_d1_ref,      # dec_fc1 : 100 -> 50   (MXU)
               w_d2_ref, b_d2_ref,      # dec_fc2 : 50  -> 1    (VPU + sublane reduce)
               *out_refs, emit_latent):
    if emit_latent:
        out_ref, lat_ref = out_refs
    else:
        (out_ref,) = out_refs

    x = x_ref[...]                                             # (1, bt) f32, lane-dense

    # ---- encode ----
    # enc_fc0 has K=1: degenerate on the MXU -> VPU outer product.
    h = _leaky_relu(w_e0_ref[...] * x + b_e0_ref[...])         # (10, bt)
    h = _leaky_relu(_dot(w_e1_ref[...], h) + b_e1_ref[...])    # (50, bt)

    # Fused mu/logvar heads, each padded to 128 sublanes -> aligned slices.
    heads = _dot(w_h_ref[...], h) + b_h_ref[...]               # (256, bt)
    mu = heads[:LATENT_PAD, :]                                 # (128, bt)
    logvar = heads[LATENT_PAD:, :]                             # (128, bt)

    # ---- reparameterize (kept in f32): z = mu + eps * exp(0.5 * logvar) ----
    # eps rows >= LATENT are zero on the host, so padded z rows are exactly 0.
    z = mu + eps_ref[...] * jnp.exp(0.5 * logvar)              # (128, bt)

    # ---- decode ----
    d = _leaky_relu(_dot(w_d_ref[...], z) + b_d_ref[...])      # (200, bt)
    d = _leaky_relu(_dot(w_d0_ref[...], d) + b_d0_ref[...])    # (100, bt)
    d = _leaky_relu(_dot(w_d1_ref[...], d) + b_d1_ref[...])    # (50, bt)

    # dec_fc2 has M=1: degenerate on the MXU -> VPU mul + sublane reduction.
    y = _leaky_relu(jnp.sum(d * w_d2_ref[...], axis=0, keepdims=True)
                    + b_d2_ref[...])                           # (1, bt)

    out_ref[...] = y
    if emit_latent:
        # Single fused, lane-dense, bf16 latent writeback (validation path).
        lat_ref[0 * LATENT_PAD:1 * LATENT_PAD, :] = mu.astype(lat_ref.dtype)
        lat_ref[1 * LATENT_PAD:2 * LATENT_PAD, :] = logvar.astype(lat_ref.dtype)
        lat_ref[2 * LATENT_PAD:3 * LATENT_PAD, :] = z.astype(lat_ref.dtype)


# ----------------------------------------------------------------------------
# Wrapper
# ----------------------------------------------------------------------------
def _default_num_tiles():
    """grid=2 only on dual-TensorCore chips (v7x); single-TC chips get grid=1."""
    try:
        kind = jax.devices()[0].device_kind.lower()
    except Exception:
        return 1
    return 2 if ("v7" in kind or "7x" in kind) else 1


def _pick_batch_tile(batch, batch_tile):
    if batch_tile is None:
        nt = _default_num_tiles()
        if nt > 1 and batch % (128 * nt) == 0:
            return batch // nt
        return batch
    assert batch % batch_tile == 0, "batch must be divisible by batch_tile"
    assert batch_tile == batch or batch_tile % 128 == 0, \
        "batch_tile must be a multiple of 128 (lane-aligned) unless it equals batch"
    return batch_tile


def sample_eps(key, batch):
    """eps ~ N(0,1) in kernel orientation (LATENT_PAD, batch); padded rows zero."""
    e = jax.random.normal(key, (LATENT, batch), jnp.float32)
    return jnp.zeros((LATENT_PAD, batch), jnp.float32).at[:LATENT].set(e)


def vae_forward(x, eps, params, *, batch_tile=None, return_latent=False):
    """x: (B, 1) f32.  eps: (LATENT_PAD, B) f32.  params: 14 fused/padded arrays.

    Returns the (B, 1) decoder output; with return_latent=True also returns
    (mu, logvar, z) as (B, LATENT_PAD) f32 (padded lanes are zero)."""
    B = x.shape[0]
    assert x.shape == (B, 1)
    assert eps.shape == (LATENT_PAD, B)
    bt = _pick_batch_tile(B, batch_tile)
    grid = (B // bt,)

    x_row = x.reshape(1, B)               # free: (B,1) and (1,B) share layout

    tile_map = lambda i: (0, i)           # batch rides the lane axis
    full_map = lambda i: (0, 0)           # grid-invariant weights: fetched once

    in_specs = [pl.BlockSpec((1, bt), tile_map),
                pl.BlockSpec((LATENT_PAD, bt), tile_map)]
    in_specs += [pl.BlockSpec(p.shape, full_map) for p in params]

    out_shape = jax.ShapeDtypeStruct((1, B), jnp.float32)
    out_specs = pl.BlockSpec((1, bt), tile_map)
    if return_latent:
        lat_shape = jax.ShapeDtypeStruct((3 * LATENT_PAD, B), jnp.bfloat16)
        lat_spec = pl.BlockSpec((3 * LATENT_PAD, bt), tile_map)
        out_shape = (out_shape, lat_shape)
        out_specs = (out_specs, lat_spec)

    weight_bytes = sum(int(p.size) * p.dtype.itemsize for p in params)
    flops_per_col = 2 * (10 + 10 * 50 + 50 * HEADS
                         + LATENT_PAD * 200 + 200 * 100 + 100 * 50 + 50)
    io_bytes = weight_bytes + B * (4 + LATENT_PAD * 4 + 4)
    if return_latent:
        io_bytes += B * 3 * LATENT_PAD * 2
    cost = pl.CostEstimate(flops=int(B * flops_per_col),
                           transcendentals=int(B * LATENT_PAD),
                           bytes_accessed=int(io_bytes))

    kernel = functools.partial(vae_kernel, emit_latent=return_latent)

    fn = pl.pallas_call(
        kernel,
        out_shape=out_shape,
        grid_spec=pltpu.PrefetchScalarGridSpec(
            num_scalar_prefetch=0,
            grid=grid,
            in_specs=in_specs,
            out_specs=out_specs,
        ),
        compiler_params=pltpu.CompilerParams(
            dimension_semantics=("parallel",)),
        cost_estimate=cost,
    )

    if return_latent:
        y_row, lat = fn(x_row, eps, *params)
        out = y_row.reshape(B, 1)
        mu = lat[:LATENT_PAD].T.astype(jnp.float32)
        logvar = lat[LATENT_PAD:2 * LATENT_PAD].T.astype(jnp.float32)
        z = lat[2 * LATENT_PAD:].T.astype(jnp.float32)
        return out, mu, logvar, z
    y_row = fn(x_row, eps, *params)
    return y_row.reshape(B, 1)


# ----------------------------------------------------------------------------
# Parameter construction (PyTorch nn.Linear init, kept in (out, in) layout,
# then fused / padded / cast for the W @ X kernel orientation).
# ----------------------------------------------------------------------------
def _init_linear(key, fan_in, fan_out):
    """U(-1/sqrt(fan_in), 1/sqrt(fan_in)); weight (out, in), bias (out, 1)."""
    kw, kb = jax.random.split(key)
    bound = 1.0 / (fan_in ** 0.5)
    w = jax.random.uniform(kw, (fan_out, fan_in), jnp.float32, -bound, bound)
    b = jax.random.uniform(kb, (fan_out, 1), jnp.float32, -bound, bound)
    return w, b


def make_params(key):
    ks = jax.random.split(key, 8)
    w_e0, b_e0 = _init_linear(ks[0], 1, 10)
    w_e1, b_e1 = _init_linear(ks[1], 10, 50)
    w_e11, b_e11 = _init_linear(ks[2], 50, LATENT)
    w_e12, b_e12 = _init_linear(ks[3], 50, LATENT)
    w_d, b_d = _init_linear(ks[4], LATENT, 200)
    w_d0, b_d0 = _init_linear(ks[5], 200, 100)
    w_d1, b_d1 = _init_linear(ks[6], 100, 50)
    w_d2, b_d2 = _init_linear(ks[7], 50, 1)

    # Fuse mu/logvar heads; pad each head 100 -> 128 output rows (zeros).
    w_h = jnp.zeros((HEADS, 50), jnp.float32)
    w_h = w_h.at[0:LATENT].set(w_e11)
    w_h = w_h.at[LATENT_PAD:LATENT_PAD + LATENT].set(w_e12)
    b_h = jnp.zeros((HEADS, 1), jnp.float32)
    b_h = b_h.at[0:LATENT].set(b_e11)
    b_h = b_h.at[LATENT_PAD:LATENT_PAD + LATENT].set(b_e12)

    # Pad dec_fc input columns 100 -> 128 (zeros kill the padded latent rows).
    w_d_pad = jnp.zeros((200, LATENT_PAD), jnp.float32).at[:, :LATENT].set(w_d)

    # Last layer as a (50, 1) column for the VPU mul + sublane reduction.
    w_d2_col = w_d2.T

    bf16 = jnp.bfloat16
    return [
        w_e0, b_e0,                       # VPU layer -> f32
        w_e1.astype(bf16), b_e1,          # MXU weights -> bf16, biases f32
        w_h.astype(bf16), b_h,
        w_d_pad.astype(bf16), b_d,
        w_d0.astype(bf16), b_d0,
        w_d1.astype(bf16), b_d1,
        w_d2_col, b_d2,                   # VPU layer -> f32
    ]


# ----------------------------------------------------------------------------
# Pure-JAX references (f32, batch-major) on the same fused/padded weights.
# ----------------------------------------------------------------------------
def encode_ref(x, params):
    w_e0, b_e0, w_e1, b_e1, w_h, b_h = params[:6]
    f = lambda a: a.astype(jnp.float32)
    h = _leaky_relu(x @ f(w_e0).T + b_e0.T)
    h = _leaky_relu(h @ f(w_e1).T + b_e1.T)
    heads = h @ f(w_h).T + b_h.T
    return heads[:, :LATENT_PAD], heads[:, LATENT_PAD:]


def decode_ref(z, params):
    w_d, b_d, w_d0, b_d0, w_d1, b_d1, w_d2_col, b_d2 = params[6:]
    f = lambda a: a.astype(jnp.float32)
    d = _leaky_relu(z @ f(w_d).T + b_d.T)
    d = _leaky_relu(d @ f(w_d0).T + b_d0.T)
    d = _leaky_relu(d @ f(w_d1).T + b_d1.T)
    return _leaky_relu(d @ w_d2_col + b_d2.T)


if __name__ == "__main__":
    root = jax.random.PRNGKey(0)
    k_params, k_x, k_eps = jax.random.split(root, 3)

    B = 256                       # small, lane-aligned batch
    params = make_params(k_params)
    x = jax.random.normal(k_x, (B, 1), jnp.float32)
    eps = sample_eps(k_eps, B)    # deterministic host-side reparameterization noise

    # Validation path: also emit mu / logvar / z (single fused bf16 output).
    out, mu, logvar, z = vae_forward(x, eps, params, return_latent=True)
    out = jax.block_until_ready(out)
    assert out.shape == (B, 1)
    assert bool(jnp.all(jnp.isfinite(out)))

    # Full f32 reference on the same (bf16-valued) weights and the same eps.
    mu_ref, logvar_ref = encode_ref(x, params)
    z_ref = mu_ref + eps.T * jnp.exp(0.5 * logvar_ref)
    out_ref = decode_ref(z_ref, params)

    assert jnp.allclose(mu, mu_ref, atol=5e-2, rtol=5e-2)
    assert jnp.allclose(logvar, logvar_ref, atol=5e-2, rtol=5e-2)
    assert jnp.allclose(z, z_ref, atol=5e-2, rtol=5e-2)
    assert jnp.allclose(out, out_ref, atol=5e-2, rtol=5e-2)

    # Production path (output only, no latent writeback) must agree.
    out2 = vae_forward(x, eps, params, return_latent=False)
    out2 = jax.block_until_ready(out2)
    assert out2.shape == (B, 1)
    assert jnp.allclose(out2, out, atol=1e-5, rtol=1e-5)

    print("KERNEL_OK")
</pallas_src>

<mosaic_0001>
module attributes {stable_mosaic.version = 11 : i64} {
  func.func @vae_kernel(%arg0: i32, %arg1: memref<1x256xf32, #tpu.memory_space<vmem>>, %arg2: memref<128x256xf32, #tpu.memory_space<vmem>>, %arg3: memref<10x1xf32, #tpu.memory_space<vmem>>, %arg4: memref<10x1xf32, #tpu.memory_space<vmem>>, %arg5: memref<50x10xbf16, #tpu.memory_space<vmem>>, %arg6: memref<50x1xf32, #tpu.memory_space<vmem>>, %arg7: memref<256x50xbf16, #tpu.memory_space<vmem>>, %arg8: memref<256x1xf32, #tpu.memory_space<vmem>>, %arg9: memref<200x128xbf16, #tpu.memory_space<vmem>>, %arg10: memref<200x1xf32, #tpu.memory_space<vmem>>, %arg11: memref<100x200xbf16, #tpu.memory_space<vmem>>, %arg12: memref<100x1xf32, #tpu.memory_space<vmem>>, %arg13: memref<50x100xbf16, #tpu.memory_space<vmem>>, %arg14: memref<50x1xf32, #tpu.memory_space<vmem>>, %arg15: memref<50x1xf32, #tpu.memory_space<vmem>>, %arg16: memref<1x1xf32, #tpu.memory_space<vmem>>, %arg17: memref<1x256xf32, #tpu.memory_space<vmem>>, %arg18: memref<384x256xbf16, #tpu.memory_space<vmem>>) attributes {dimension_semantics = [#tpu.dimension_semantics<parallel>], iteration_bounds = array<i64: 1>, scalar_prefetch = 0 : i64, scratch_operands = 0 : i64, tpu.core_type = #tpu.core_type<tc>, window_params = [{transform_indices = @transform_0, window_bounds = array<i64: 1, 256>}, {transform_indices = @transform_1, window_bounds = array<i64: 128, 256>}, {pipeline_mode = #tpu.pipeline_mode<synchronous>, transform_indices = @transform_2, window_bounds = array<i64: 10, 1>}, {pipeline_mode = #tpu.pipeline_mode<synchronous>, transform_indices = @transform_3, window_bounds = array<i64: 10, 1>}, {pipeline_mode = #tpu.pipeline_mode<synchronous>, transform_indices = @transform_4, window_bounds = array<i64: 50, 10>}, {pipeline_mode = #tpu.pipeline_mode<synchronous>, transform_indices = @transform_5, window_bounds = array<i64: 50, 1>}, {pipeline_mode = #tpu.pipeline_mode<synchronous>, transform_indices = @transform_6, window_bounds = array<i64: 256, 50>}, {pipeline_mode = #tpu.pipeline_mode<synchronous>, transform_indices = @transform_7, window_bounds = array<i64: 256, 1>}, {pipeline_mode = #tpu.pipeline_mode<synchronous>, transform_indices = @transform_8, window_bounds = array<i64: 200, 128>}, {pipeline_mode = #tpu.pipeline_mode<synchronous>, transform_indices = @transform_9, window_bounds = array<i64: 200, 1>}, {pipeline_mode = #tpu.pipeline_mode<synchronous>, transform_indices = @transform_10, window_bounds = array<i64: 100, 200>}, {pipeline_mode = #tpu.pipeline_mode<synchronous>, transform_indices = @transform_11, window_bounds = array<i64: 100, 1>}, {pipeline_mode = #tpu.pipeline_mode<synchronous>, transform_indices = @transform_12, window_bounds = array<i64: 50, 100>}, {pipeline_mode = #tpu.pipeline_mode<synchronous>, transform_indices = @transform_13, window_bounds = array<i64: 50, 1>}, {pipeline_mode = #tpu.pipeline_mode<synchronous>, transform_indices = @transform_14, window_bounds = array<i64: 50, 1>}, {pipeline_mode = #tpu.pipeline_mode<synchronous>, transform_indices = @transform_15, window_bounds = array<i64: 1, 1>}, {transform_indices = @transform_16, window_bounds = array<i64: 1, 256>}, {transform_indices = @transform_17, window_bounds = array<i64: 384, 256>}]} {
    %c0 = arith.constant 0 : index
    %c0_0 = arith.constant 0 : index
    %0 = vector.load %arg1[%c0, %c0_0] : memref<1x256xf32, #tpu.memory_space<vmem>>, vector<1x256xf32>
    %c0_1 = arith.constant 0 : index
    %c0_2 = arith.constant 0 : index
    %1 = vector.load %arg3[%c0_1, %c0_2] : memref<10x1xf32, #tpu.memory_space<vmem>>, vector<10x1xf32>
    %2 = vector.broadcast %1 : vector<10x1xf32> to vector<10x256xf32>
    %3 = vector.broadcast %0 : vector<1x256xf32> to vector<10x256xf32>
    %4 = arith.mulf %2, %3 : vector<10x256xf32>
    %c0_3 = arith.constant 0 : index
    %c0_4 = arith.constant 0 : index
    %5 = vector.load %arg4[%c0_3, %c0_4] : memref<10x1xf32, #tpu.memory_space<vmem>>, vector<10x1xf32>
    %6 = vector.broadcast %5 : vector<10x1xf32> to vector<10x256xf32>
    %7 = arith.addf %4, %6 : vector<10x256xf32>
    %cst = arith.constant 0.000000e+00 : f32
    %8 = vector.broadcast %cst : f32 to vector<10x256xf32>
    %9 = arith.cmpf ogt, %7, %8 : vector<10x256xf32>
    %cst_5 = arith.constant 0.00999999977 : f32
    %10 = vector.broadcast %cst_5 : f32 to vector<10x256xf32>
    %11 = arith.mulf %10, %7 : vector<10x256xf32>
    %12 = arith.select %9, %7, %11 : vector<10x256xi1>, vector<10x256xf32>
    %c0_6 = arith.constant 0 : index
    %c0_7 = arith.constant 0 : index
    %13 = vector.load %arg5[%c0_6, %c0_7] : memref<50x10xbf16, #tpu.memory_space<vmem>>, vector<50x10xbf16>
    %14 = arith.truncf %12 : vector<10x256xf32> to vector<10x256xbf16>
    %cst_8 = arith.constant dense<0.000000e+00> : vector<50x256xf32>
    %15 = tpu.matmul %13, %14, %cst_8 {dimension_numbers = #tpu.dot_dimension_numbers<[1], [0], [0], [1], [0, 0, 1, 1], [], []>} : vector<50x10xbf16>, vector<10x256xbf16>, vector<50x256xf32> -> vector<50x256xf32>
    %c0_9 = arith.constant 0 : index
    %c0_10 = arith.constant 0 : index
    %16 = vector.load %arg6[%c0_9, %c0_10] : memref<50x1xf32, #tpu.memory_space<vmem>>, vector<50x1xf32>
    %17 = vector.broadcast %16 : vector<50x1xf32> to vector<50x256xf32>
    %18 = arith.addf %15, %17 : vector<50x256xf32>
    %cst_11 = arith.constant 0.000000e+00 : f32
    %19 = vector.broadcast %cst_11 : f32 to vector<50x256xf32>
    %20 = arith.cmpf ogt, %18, %19 : vector<50x256xf32>
    %cst_12 = arith.constant 0.00999999977 : f32
    %21 = vector.broadcast %cst_12 : f32 to vector<50x256xf32>
    %22 = arith.mulf %21, %18 : vector<50x256xf32>
    %23 = arith.select %20, %18, %22 : vector<50x256xi1>, vector<50x256xf32>
    %c0_13 = arith.constant 0 : index
    %c0_14 = arith.constant 0 : index
    %24 = vector.load %arg7[%c0_13, %c0_14] : memref<256x50xbf16, #tpu.memory_space<vmem>>, vector<256x50xbf16>
    %25 = arith.truncf %23 : vector<50x256xf32> to vector<50x256xbf16>
    %cst_15 = arith.constant dense<0.000000e+00> : vector<256x256xf32>
    %26 = tpu.matmul %24, %25, %cst_15 {dimension_numbers = #tpu.dot_dimension_numbers<[1], [0], [0], [1], [0, 0, 1, 1], [], []>} : vector<256x50xbf16>, vector<50x256xbf16>, vector<256x256xf32> -> vector<256x256xf32>
    %c0_16 = arith.constant 0 : index
    %c0_17 = arith.constant 0 : index
    %27 = vector.load %arg8[%c0_16, %c0_17] : memref<256x1xf32, #tpu.memory_space<vmem>>, vector<256x1xf32>
    %28 = vector.broadcast %27 : vector<256x1xf32> to vector<256x256xf32>
    %29 = arith.addf %26, %28 : vector<256x256xf32>
    %30 = vector.extract_strided_slice %29 {offsets = [0, 0], sizes = [128, 256], strides = [1, 1]} : vector<256x256xf32> to vector<128x256xf32>
    %31 = vector.extract_strided_slice %29 {offsets = [128, 0], sizes = [128, 256], strides = [1, 1]} : vector<256x256xf32> to vector<128x256xf32>
    %c0_18 = arith.constant 0 : index
    %c0_19 = arith.constant 0 : index
    %32 = vector.load %arg2[%c0_18, %c0_19] : memref<128x256xf32, #tpu.memory_space<vmem>>, vector<128x256xf32>
    %cst_20 = arith.constant 5.000000e-01 : f32
    %33 = vector.broadcast %cst_20 : f32 to vector<128x256xf32>
    %34 = arith.mulf %33, %31 : vector<128x256xf32>
    %35 = math.exp %34 : vector<128x256xf32>
    %36 = arith.mulf %32, %35 : vector<128x256xf32>
    %37 = arith.addf %30, %36 : vector<128x256xf32>
    %c0_21 = arith.constant 0 : index
    %c0_22 = arith.constant 0 : index
    %38 = vector.load %arg9[%c0_21, %c0_22] : memref<200x128xbf16, #tpu.memory_space<vmem>>, vector<200x128xbf16>
    %39 = arith.truncf %37 : vector<128x256xf32> to vector<128x256xbf16>
    %cst_23 = arith.constant dense<0.000000e+00> : vector<200x256xf32>
    %40 = tpu.matmul %38, %39, %cst_23 {dimension_numbers = #tpu.dot_dimension_numbers<[1], [0], [0], [1], [0, 0, 1, 1], [], []>} : vector<200x128xbf16>, vector<128x256xbf16>, vector<200x256xf32> -> vector<200x256xf32>
    %c0_24 = arith.constant 0 : index
    %c0_25 = arith.constant 0 : index
    %41 = vector.load %arg10[%c0_24, %c0_25] : memref<200x1xf32, #tpu.memory_space<vmem>>, vector<200x1xf32>
    %42 = vector.broadcast %41 : vector<200x1xf32> to vector<200x256xf32>
    %43 = arith.addf %40, %42 : vector<200x256xf32>
    %cst_26 = arith.constant 0.000000e+00 : f32
    %44 = vector.broadcast %cst_26 : f32 to vector<200x256xf32>
    %45 = arith.cmpf ogt, %43, %44 : vector<200x256xf32>
    %cst_27 = arith.constant 0.00999999977 : f32
    %46 = vector.broadcast %cst_27 : f32 to vector<200x256xf32>
    %47 = arith.mulf %46, %43 : vector<200x256xf32>
    %48 = arith.select %45, %43, %47 : vector<200x256xi1>, vector<200x256xf32>
    %c0_28 = arith.constant 0 : index
    %c0_29 = arith.constant 0 : index
    %49 = vector.load %arg11[%c0_28, %c0_29] : memref<100x200xbf16, #tpu.memory_space<vmem>>, vector<100x200xbf16>
    %50 = arith.truncf %48 : vector<200x256xf32> to vector<200x256xbf16>
    %cst_30 = arith.constant dense<0.000000e+00> : vector<100x256xf32>
    %51 = tpu.matmul %49, %50, %cst_30 {dimension_numbers = #tpu.dot_dimension_numbers<[1], [0], [0], [1], [0, 0, 1, 1], [], []>} : vector<100x200xbf16>, vector<200x256xbf16>, vector<100x256xf32> -> vector<100x256xf32>
    %c0_31 = arith.constant 0 : index
    %c0_32 = arith.constant 0 : index
    %52 = vector.load %arg12[%c0_31, %c0_32] : memref<100x1xf32, #tpu.memory_space<vmem>>, vector<100x1xf32>
    %53 = vector.broadcast %52 : vector<100x1xf32> to vector<100x256xf32>
    %54 = arith.addf %51, %53 : vector<100x256xf32>
    %cst_33 = arith.constant 0.000000e+00 : f32
    %55 = vector.broadcast %cst_33 : f32 to vector<100x256xf32>
    %56 = arith.cmpf ogt, %54, %55 : vector<100x256xf32>
    %cst_34 = arith.constant 0.00999999977 : f32
    %57 = vector.broadcast %cst_34 : f32 to vector<100x256xf32>
    %58 = arith.mulf %57, %54 : vector<100x256xf32>
    %59 = arith.select %56, %54, %58 : vector<100x256xi1>, vector<100x256xf32>
    %c0_35 = arith.constant 0 : index
    %c0_36 = arith.constant 0 : index
    %60 = vector.load %arg13[%c0_35, %c0_36] : memref<50x100xbf16, #tpu.memory_space<vmem>>, vector<50x100xbf16>
    %61 = arith.truncf %59 : vector<100x256xf32> to vector<100x256xbf16>
    %cst_37 = arith.constant dense<0.000000e+00> : vector<50x256xf32>
    %62 = tpu.matmul %60, %61, %cst_37 {dimension_numbers = #tpu.dot_dimension_numbers<[1], [0], [0], [1], [0, 0, 1, 1], [], []>} : vector<50x100xbf16>, vector<100x256xbf16>, vector<50x256xf32> -> vector<50x256xf32>
    %c0_38 = arith.constant 0 : index
    %c0_39 = arith.constant 0 : index
    %63 = vector.load %arg14[%c0_38, %c0_39] : memref<50x1xf32, #tpu.memory_space<vmem>>, vector<50x1xf32>
    %64 = vector.broadcast %63 : vector<50x1xf32> to vector<50x256xf32>
    %65 = arith.addf %62, %64 : vector<50x256xf32>
    %cst_40 = arith.constant 0.000000e+00 : f32
    %66 = vector.broadcast %cst_40 : f32 to vector<50x256xf32>
    %67 = arith.cmpf ogt, %65, %66 : vector<50x256xf32>
    %cst_41 = arith.constant 0.00999999977 : f32
    %68 = vector.broadcast %cst_41 : f32 to vector<50x256xf32>
    %69 = arith.mulf %68, %65 : vector<50x256xf32>
    %70 = arith.select %67, %65, %69 : vector<50x256xi1>, vector<50x256xf32>
    %c0_42 = arith.constant 0 : index
    %c0_43 = arith.constant 0 : index
    %71 = vector.load %arg15[%c0_42, %c0_43] : memref<50x1xf32, #tpu.memory_space<vmem>>, vector<50x1xf32>
    %72 = vector.broadcast %71 : vector<50x1xf32> to vector<50x256xf32>
    %73 = arith.mulf %70, %72 : vector<50x256xf32>
    %cst_44 = arith.constant dense<0.000000e+00> : vector<256xf32>
    %74 = vector.multi_reduction <add>, %73, %cst_44 [0] : vector<50x256xf32> to vector<256xf32>
    %75 = vector.shape_cast %74 : vector<256xf32> to vector<1x256xf32>
    %c0_45 = arith.constant 0 : index
    %c0_46 = arith.constant 0 : index
    %76 = vector.load %arg16[%c0_45, %c0_46] : memref<1x1xf32, #tpu.memory_space<vmem>>, vector<1x1xf32>
    %77 = vector.broadcast %76 : vector<1x1xf32> to vector<1x256xf32>
    %78 = arith.addf %75, %77 : vector<1x256xf32>
    %cst_47 = arith.constant 0.000000e+00 : f32
    %79 = vector.broadcast %cst_47 : f32 to vector<1x256xf32>
    %80 = arith.cmpf ogt, %78, %79 : vector<1x256xf32>
    %cst_48 = arith.constant 0.00999999977 : f32
    %81 = vector.broadcast %cst_48 : f32 to vector<1x256xf32>
    %82 = arith.mulf %81, %78 : vector<1x256xf32>
    %83 = arith.select %80, %78, %82 : vector<1x256xi1>, vector<1x256xf32>
    %c0_49 = arith.constant 0 : index
    %c0_50 = arith.constant 0 : index
    %84 = vector.load %arg17[%c0_49, %c0_50] : memref<1x256xf32, #tpu.memory_space<vmem>>, vector<1x256xf32>
    tpu.vector_store %arg17[%c0_49, %c0_50], %83 {strides = array<i32>} : memref<1x256xf32, #tpu.memory_space<vmem>>, vector<1x256xf32>,
    %85 = arith.truncf %30 : vector<128x256xf32> to vector<128x256xbf16>
    %c0_51 = arith.constant 0 : index
    %c0_52 = arith.constant 0 : index
    %86 = vector.load %arg18[%c0_51, %c0_52] : memref<384x256xbf16, #tpu.memory_space<vmem>>, vector<128x256xbf16>
    tpu.vector_store %arg18[%c0_51, %c0_52], %85 {strides = array<i32>} : memref<384x256xbf16, #tpu.memory_space<vmem>>, vector<128x256xbf16>,
    %87 = arith.truncf %31 : vector<128x256xf32> to vector<128x256xbf16>
    %c128 = arith.constant 128 : index
    %c0_53 = arith.constant 0 : index
    %88 = vector.load %arg18[%c128, %c0_53] : memref<384x256xbf16, #tpu.memory_space<vmem>>, vector<128x256xbf16>
    tpu.vector_store %arg18[%c128, %c0_53], %87 {strides = array<i32>} : memref<384x256xbf16, #tpu.memory_space<vmem>>, vector<128x256xbf16>,
    %89 = arith.truncf %37 : vector<128x256xf32> to vector<128x256xbf16>
    %c256 = arith.constant 256 : index
    %c0_54 = arith.constant 0 : index
    %90 = vector.load %arg18[%c256, %c0_54] : memref<384x256xbf16, #tpu.memory_space<vmem>>, vector<128x256xbf16>
    tpu.vector_store %arg18[%c256, %c0_54], %89 {strides = array<i32>} : memref<384x256xbf16, #tpu.memory_space<vmem>>, vector<128x256xbf16>,
    return
  }
  func.func @transform_0(%arg0: i32) -> (i32, i32) {
    %c0_i32 = arith.constant 0 : i32
    %c0_i32_0 = arith.constant 0 : i32
    return %c0_i32, %arg0 : i32, i32
  }
  func.func @transform_1(%arg0: i32) -> (i32, i32) {
    %c0_i32 = arith.constant 0 : i32
    %c0_i32_0 = arith.constant 0 : i32
    return %c0_i32, %arg0 : i32, i32
  }
  func.func @transform_2(%arg0: i32) -> (i32, i32) {
    %c0_i32 = arith.constant 0 : i32
    %c0_i32_0 = arith.constant 0 : i32
    %c0_i32_1 = arith.constant 0 : i32
    return %c0_i32, %c0_i32_0 : i32, i32
  }
  func.func @transform_3(%arg0: i32) -> (i32, i32) {
    %c0_i32 = arith.constant 0 : i32
    %c0_i32_0 = arith.constant 0 : i32
    %c0_i32_1 = arith.constant 0 : i32
    return %c0_i32, %c0_i32_0 : i32, i32
  }
  func.func @transform_4(%arg0: i32) -> (i32, i32) {
    %c0_i32 = arith.constant 0 : i32
    %c0_i32_0 = arith.constant 0 : i32
    %c0_i32_1 = arith.constant 0 : i32
    return %c0_i32, %c0_i32_0 : i32, i32
  }
  func.func @transform_5(%arg0: i32) -> (i32, i32) {
    %c0_i32 = arith.constant 0 : i32
    %c0_i32_0 = arith.constant 0 : i32
    %c0_i32_1 = arith.constant 0 : i32
    return %c0_i32, %c0_i32_0 : i32, i32
  }
  func.func @transform_6(%arg0: i32) -> (i32, i32) {
    %c0_i32 = arith.constant 0 : i32
    %c0_i32_0 = arith.constant 0 : i32
    %c0_i32_1 = arith.constant 0 : i32
    return %c0_i32, %c0_i32_0 : i32, i32
  }
  func.func @transform_7(%arg0: i32) -> (i32, i32) {
    %c0_i32 = arith.constant 0 : i32
    %c0_i32_0 = arith.constant 0 : i32
    %c0_i32_1 = arith.constant 0 : i32
    return %c0_i32, %c0_i32_0 : i32, i32
  }
  func.func @transform_8(%arg0: i32) -> (i32, i32) {
    %c0_i32 = arith.constant 0 : i32
    %c0_i32_0 = arith.constant 0 : i32
    %c0_i32_1 = arith.constant 0 : i32
    return %c0_i32, %c0_i32_0 : i32, i32
  }
  func.func @transform_9(%arg0: i32) -> (i32, i32) {
    %c0_i32 = arith.constant 0 : i32
    %c0_i32_0 = arith.constant 0 : i32
    %c0_i32_1 = arith.constant 0 : i32
    return %c0_i32, %c0_i32_0 : i32, i32
  }
  func.func @transform_10(%arg0: i32) -> (i32, i32) {
    %c0_i32 = arith.constant 0 : i32
    %c0_i32_0 = arith.constant 0 : i32
    %c0_i32_1 = arith.constant 0 : i32
    return %c0_i32, %c0_i32_0 : i32, i32
  }
  func.func @transform_11(%arg0: i32) -> (i32, i32) {
    %c0_i32 = arith.constant 0 : i32
    %c0_i32_0 = arith.constant 0 : i32
    %c0_i32_1 = arith.constant 0 : i32
    return %c0_i32, %c0_i32_0 : i32, i32
  }
  func.func @transform_12(%arg0: i32) -> (i32, i32) {
    %c0_i32 = arith.constant 0 : i32
    %c0_i32_0 = arith.constant 0 : i32
    %c0_i32_1 = arith.constant 0 : i32
    return %c0_i32, %c0_i32_0 : i32, i32
  }
  func.func @transform_13(%arg0: i32) -> (i32, i32) {
    %c0_i32 = arith.constant 0 : i32
    %c0_i32_0 = arith.constant 0 : i32
    %c0_i32_1 = arith.constant 0 : i32
    return %c0_i32, %c0_i32_0 : i32, i32
  }
  func.func @transform_14(%arg0: i32) -> (i32, i32) {
    %c0_i32 = arith.constant 0 : i32
    %c0_i32_0 = arith.constant 0 : i32
    %c0_i32_1 = arith.constant 0 : i32
    return %c0_i32, %c0_i32_0 : i32, i32
  }
  func.func @transform_15(%arg0: i32) -> (i32, i32) {
    %c0_i32 = arith.constant 0 : i32
    %c0_i32_0 = arith.constant 0 : i32
    %c0_i32_1 = arith.constant 0 : i32
    return %c0_i32, %c0_i32_0 : i32, i32
  }
  func.func @transform_16(%arg0: i32) -> (i32, i32) {
    %c0_i32 = arith.constant 0 : i32
    %c0_i32_0 = arith.constant 0 : i32
    return %c0_i32, %arg0 : i32, i32
  }
  func.func @transform_17(%arg0: i32) -> (i32, i32) {
    %c0_i32 = arith.constant 0 : i32
    %c0_i32_0 = arith.constant 0 : i32
    return %c0_i32, %arg0 : i32, i32
  }
}

</mosaic_0001>

<llo_original>
// kernel: tpu_custom_call.1
$region0: #{tpu_custom_call.1}
  #allocation0 [shape = 'u32[]', space=smem, size = 0x4, offset = 0x4, fixed_abs, tag = 'smem constant byte address 0x4 - core index']
  #allocation1 [shape = 'u32[144,128]{1,0:T(1,128)}', space=vmem, size = 0x12000, scoped, tag = 'internal scratch']
  #allocation2 [shape = 'f32[1,1]{1,0:T(1,128)S(1)}', space=vmem, size = 0x200, scoped, tag = 'scoped memory for tpu_custom_call.1']
  %s0 = inlined_call_operand.vmem [shape: f32[1,256], index: 0, kind: input, shape index: {}]
  %s1 = inlined_call_operand.vmem [shape: f32[128,256], index: 1, kind: input, shape index: {}]
  %s2 = inlined_call_operand.vmem [shape: f32[10,1], index: 2, kind: input, shape index: {}]
  %s3 = inlined_call_operand.vmem [shape: f32[10,1], index: 3, kind: input, shape index: {}]
  %s4 = inlined_call_operand.vmem [shape: bf16[50,10], index: 4, kind: input, shape index: {}]
  %s5 = inlined_call_operand.vmem [shape: f32[50,1], index: 5, kind: input, shape index: {}]
  %s6 = inlined_call_operand.vmem [shape: bf16[256,50], index: 6, kind: input, shape index: {}]
  %s7 = inlined_call_operand.vmem [shape: f32[256,1], index: 7, kind: input, shape index: {}]
  %s8 = inlined_call_operand.vmem [shape: bf16[200,128], index: 8, kind: input, shape index: {}]
  %s9 = inlined_call_operand.vmem [shape: f32[200,1], index: 9, kind: input, shape index: {}]
  %s10 = inlined_call_operand.vmem [shape: bf16[100,200], index: 10, kind: input, shape index: {}]
  %s11 = inlined_call_operand.vmem [shape: f32[100,1], index: 11, kind: input, shape index: {}]
  %s12 = inlined_call_operand.vmem [shape: bf16[50,100], index: 12, kind: input, shape index: {}]
  %s13 = inlined_call_operand.vmem [shape: f32[50,1], index: 13, kind: input, shape index: {}]
  %s14 = inlined_call_operand.vmem [shape: f32[50,1], index: 14, kind: input, shape index: {}]
  %s15 = inlined_call_operand.<no memory space> [shape: f32[1,1], index: 15, kind: input, shape index: {}]
  %s16 = inlined_call_operand.hbm [shape: f32[1,256], index: 16, kind: output, shape index: {0}]
  %s17 = inlined_call_operand.hbm [shape: bf16[384,256], index: 17, kind: output, shape index: {1}]
  %18 = xla_tuple %s16, %s17
  %s19 = sld [smem:[#allocation0]]
  $region82: #{tpu_custom_call.1} parent=0
    _
  %s21 = ssub.s32 1, %s19
  %s22 = scalar_select 0, %s21, %s19
  %v23 = vstv %s15
  %24 = vst [vmem:[#allocation2] sm:$0x1] %v23
  $region1: #{tpu_custom_call.1} parent=0
    #allocation3 [shape = 'u8[1024]{0}', space=vmem, size = 0x400, scoped, tag = 'output window, operand 0, single buffered']
    #allocation4 [shape = 's32[1]{0}', space=sflag, size = 0x4, scoped, tag = 'scoped memory for tpu_custom_call.1']
    #allocation5 [shape = 'u8[196608]{0}', space=vmem, size = 0x30000, scoped, tag = 'output window, operand 1, single buffered']
    #allocation6 [shape = 's32[1]{0}', space=sflag, size = 0x4, scoped, tag = 'scoped memory for tpu_custom_call.1']
    %25 = vsyncpa [#allocation4], 0
    %26 = vsyncpa [#allocation6], 0
    // Predicated region
    $region2: #{tpu_custom_call.1} parent=1 // pred_check
      _
    $region3: #{tpu_custom_call.1} parent=1 // pred_check_branch
      %28 = sbr.rel (0) target = $region5
    $region4: #{tpu_custom_call.1} parent=1 // pred_region
      _
    $region5: #{tpu_custom_call.1} parent=1 // pred_fallthru
      _
    // Predicated region
    $region6: #{tpu_custom_call.1} parent=1 // pred_check
      _
    $region7: #{tpu_custom_call.1} parent=1 // pred_check_branch
      %30 = sbr.rel (0) target = $region9
    $region8: #{tpu_custom_call.1} parent=1 // pred_region
      _
    $region9: #{tpu_custom_call.1} parent=1 // pred_fallthru
      _
    // Predicated region
    $region10: #{tpu_custom_call.1} parent=1 // pred_check
      _
    $region11: #{tpu_custom_call.1} parent=1 // pred_check_branch
      %32 = sbr.rel (0) target = $region13
    $region12: #{tpu_custom_call.1} parent=1 // pred_region
      _
    $region13: #{tpu_custom_call.1} parent=1 // pred_fallthru
      _
    // Predicated region
    $region14: #{tpu_custom_call.1} parent=1 // pred_check
      _
    $region15: #{tpu_custom_call.1} parent=1 // pred_check_branch
      %34 = sbr.rel (0) target = $region17
    $region16: #{tpu_custom_call.1} parent=1 // pred_region
      _
    $region17: #{tpu_custom_call.1} parent=1 // pred_fallthru
      _
    // Predicated region
    $region18: #{tpu_custom_call.1} parent=1 // pred_check
      _
    $region19: #{tpu_custom_call.1} parent=1 // pred_check_branch
      %36 = sbr.rel (0) target = $region21
    $region20: #{tpu_custom_call.1} parent=1 // pred_region
      _
    $region21: #{tpu_custom_call.1} parent=1 // pred_fallthru
      _
    // Predicated region
    $region22: #{tpu_custom_call.1} parent=1 // pred_check
      _
    $region23: #{tpu_custom_call.1} parent=1 // pred_check_branch
      %38 = sbr.rel (0) target = $region25
    $region24: #{tpu_custom_call.1} parent=1 // pred_region
      _
    $region25: #{tpu_custom_call.1} parent=1 // pred_fallthru
      _
    // Predicated region
    $region26: #{tpu_custom_call.1} parent=1 // pred_check
      _
    $region27: #{tpu_custom_call.1} parent=1 // pred_check_branch
      %40 = sbr.rel (0) target = $region29
    $region28: #{tpu_custom_call.1} parent=1 // pred_region
      _
    $region29: #{tpu_custom_call.1} parent=1 // pred_fallthru
      _
    // Predicated region
    $region30: #{tpu_custom_call.1} parent=1 // pred_check
      _
    $region31: #{tpu_custom_call.1} parent=1 // pred_check_branch
      %42 = sbr.rel (0) target = $region33
    $region32: #{tpu_custom_call.1} parent=1 // pred_region
      _
    $region33: #{tpu_custom_call.1} parent=1 // pred_fallthru
      _
    // Predicated region
    $region34: #{tpu_custom_call.1} parent=1 // pred_check
      _
    $region35: #{tpu_custom_call.1} parent=1 // pred_check_branch
      %44 = sbr.rel (0) target = $region37
    $region36: #{tpu_custom_call.1} parent=1 // pred_region
      _
    $region37: #{tpu_custom_call.1} parent=1 // pred_fallthru
      _
    // Predicated region
    $region38: #{tpu_custom_call.1} parent=1 // pred_check
      _
    $region39: #{tpu_custom_call.1} parent=1 // pred_check_branch
      %46 = sbr.rel (0) target = $region41
    $region40: #{tpu_custom_call.1} parent=1 // pred_region
      _
    $region41: #{tpu_custom_call.1} parent=1 // pred_fallthru
      _
    // Predicated region
    $region42: #{tpu_custom_call.1} parent=1 // pred_check
      _
    $region43: #{tpu_custom_call.1} parent=1 // pred_check_branch
      %48 = sbr.rel (0) target = $region45
    $region44: #{tpu_custom_call.1} parent=1 // pred_region
      _
    $region45: #{tpu_custom_call.1} parent=1 // pred_fallthru
      _
    // Predicated region
    $region46: #{tpu_custom_call.1} parent=1 // pred_check
      _
    $region47: #{tpu_custom_call.1} parent=1 // pred_check_branch
      %50 = sbr.rel (0) target = $region49
    $region48: #{tpu_custom_call.1} parent=1 // pred_region
      _
    $region49: #{tpu_custom_call.1} parent=1 // pred_fallthru
      _
    // Predicated region
    $region50: #{tpu_custom_call.1} parent=1 // pred_check
      _
    $region51: #{tpu_custom_call.1} parent=1 // pred_check_branch
      %52 = sbr.rel (0) target = $region53
    $region52: #{tpu_custom_call.1} parent=1 // pred_region
      _
    $region53: #{tpu_custom_call.1} parent=1 // pred_fallthru
      _
    // Predicated region
    $region54: #{tpu_custom_call.1} parent=1 // pred_check
      _
    $region55: #{tpu_custom_call.1} parent=1 // pred_check_branch
      %54 = sbr.rel (0) target = $region57
    $region56: #{tpu_custom_call.1} parent=1 // pred_region
      _
    $region57: #{tpu_custom_call.1} parent=1 // pred_fallthru
      _
    // Predicated region
    $region58: #{tpu_custom_call.1} parent=1 // pred_check
      _
    $region59: #{tpu_custom_call.1} parent=1 // pred_check_branch
      %56 = sbr.rel (0) target = $region61
    $region60: #{tpu_custom_call.1} parent=1 // pred_region
      _
    $region61: #{tpu_custom_call.1} parent=1 // pred_fallthru
      _
    // Predicated region
    $region62: #{tpu_custom_call.1} parent=1 // pred_check
      _
    $region63: #{tpu_custom_call.1} parent=1 // pred_check_branch
      %58 = sbr.rel (0) target = $region65
    $region64: #{tpu_custom_call.1} parent=1 // pred_region
      _
    $region65: #{tpu_custom_call.1} parent=1 // pred_fallthru
      _
    %v60 = vld [vmem:[%s0] sm:$0x3]
    %v61 = vld [vmem:[%s2] sm:$0xff]
    %v62 = vld [vmem:[%s2 + $0x8] sm:$0x3]
    %64 = vset.pattern.permute.xlu0 0
    %65 = vperm.xlu0 %64, %v61
    %v66 = vpop.permute.xlu0 %65
    %69 = vset.pattern.permute.xlu0 0
    %70 = vperm.xlu0 %69, %v62
    %v71 = vpop.permute.xlu0 %70
    %v74 = vlaneseq
    %v75 = vshrl.u32 %v74, 7
    %v76 = vsub.s32 0, %v75
    %v77 = vrot.slane %v60, %v76
    %v78 = vlaneseq
    %v79 = vshrl.u32 %v78, 7
    %v80 = vsub.s32 1, %v79
    %v81 = vrot.slane %v60, %v80
    %v84 = vmul.f32 %v66, %v77
    %v85 = vmul.f32 %v66, %v81
    %v86 = vmul.f32 %v71, %v77
    %v87 = vmul.f32 %v71, %v81
    %v88 = vld [vmem:[%s3] sm:$0xff]
    %v89 = vld [vmem:[%s3 + $0x8] sm:$0x3]
    %91 = vset.pattern.permute.xlu0 0
    %92 = vperm.xlu0 %91, %v88
    %v93 = vpop.permute.xlu0 %92
    %96 = vset.pattern.permute.xlu0 0
    %97 = vperm.xlu0 %96, %v89
    %v98 = vpop.permute.xlu0 %97
    %v100 = vadd.f32 %v84, %v93
    %v101 = vadd.f32 %v85, %v93
    %v102 = vadd.f32 %v86, %v98
    %v103 = vadd.f32 %v87, %v98
    %vm104 = vcmp.gt.f32.partialorder %v100, 0.0
    %vm105 = vcmp.gt.f32.partialorder %v101, 0.0
    %vm106 = vcmp.gt.f32.partialorder %v102, 0.0
    %vm107 = vcmp.gt.f32.partialorder %v103, 0.0
    %v108 = vmul.f32 %v100, 0.01
    %v109 = vmul.f32 %v101, 0.01
    %v110 = vmul.f32 %v102, 0.01
    %v111 = vmul.f32 %v103, 0.01
    %v112 = vsel %vm104, %v100, %v108
    %v113 = vsel %vm105, %v101, %v109
    %v114 = vsel %vm106, %v102, %v110
    %v115 = vsel %vm107, %v103, %v111
    %v116 = vld [vmem:[%s4] sm:$0xf]
    %v117 = vld [vmem:[%s4 + $0x4] sm:$0xf]
    %v118 = vld [vmem:[%s4 + $0x8] sm:$0xf]
    %v119 = vld [vmem:[%s4 + $0xc] sm:$0xf]
    %v120 = vld [vmem:[%s4 + $0x10] sm:$0xf]
    %v121 = vld [vmem:[%s4 + $0x14] sm:$0xf]
    %v122 = vld [vmem:[%s4 + $0x18] sm:$0x1]
    %v123 = vpack.c.bf16 %v114, %v112
    %v124 = vpack.c.bf16 %v115, %v113
    %v125 = vld [vmem:[%s5] sm:$0xff]
    %v126 = vld [vmem:[%s5 + $0x8] sm:$0xff]
    %v127 = vld [vmem:[%s5 + $0x10] sm:$0xff]
    %v128 = vld [vmem:[%s5 + $0x18] sm:$0xff]
    %v129 = vld [vmem:[%s5 + $0x20] sm:$0xff]
    %v130 = vld [vmem:[%s5 + $0x28] sm:$0xff]
    %v131 = vld [vmem:[%s5 + $0x30] sm:$0x3]
    %133 = vset.pattern.permute.xlu0 0
    %134 = vperm.xlu0 %133, %v125
    %v135 = vpop.permute.xlu0 %134
    %138 = vset.pattern.permute.xlu0 0
    %139 = vperm.xlu0 %138, %v126
    %v140 = vpop.permute.xlu0 %139
    %143 = vset.pattern.permute.xlu0 0
    %144 = vperm.xlu0 %143, %v127
    %v145 = vpop.permute.xlu0 %144
    %148 = vset.pattern.permute.xlu0 0
    %149 = vperm.xlu0 %148, %v128
    %v150 = vpop.permute.xlu0 %149
    %153 = vset.pattern.permute.xlu0 0
    %154 = vperm.xlu0 %153, %v129
    %v155 = vpop.permute.xlu0 %154
    %158 = vset.pattern.permute.xlu0 0
    %159 = vperm.xlu0 %158, %v130
    %v160 = vpop.permute.xlu0 %159
    %163 = vset.pattern.permute.xlu0 0
    %164 = vperm.xlu0 %163, %v131
    %v165 = vpop.permute.xlu0 %164
    %v174 = vunpack.c.l.b16 %v116
    %v175 = vunpack.c.l.b16 %v117
    %v176 = vunpack.c.l.b16 %v118
    %v177 = vunpack.c.l.b16 %v119
    %v178 = vunpack.c.l.b16 %v120
    %v179 = vunpack.c.l.b16 %v121
    %v180 = vunpack.c.l.b16 %v122
    %v181 = vpack.c.b16 %v175, %v174
    %v182 = vpack.c.b16 %v177, %v176
    %v183 = vpack.c.b16 %v179, %v178
    %v184 = vpack.c.b16 %v180, %v180
    %vm185 = vcmask 80896
    %v187 = vsel %vm185, %v181, 0
    %v190 = vsel %vm185, %v182, 0
    %v193 = vsel %vm185, %v183, 0
    %v196 = vsel %vm185, %v184, 0
    %vm198 = vcmask 1044480
    %v200 = vsel %vm198, %v123, 0
    %v203 = vsel %vm198, %v124, 0
    %205 = vmatprep.subr.bf16.mxu0 0
    %206 = vmatpush1.bf16.msra.mxu0 0
    %207 = vmatprep.subr.bf16.mxu0 0
    %208 = vmatpush1.bf16.msra.mxu0 0
    %209 = vmatprep.subr.bf16.mxu0 0
    %210 = vmatpush1.bf16.msra.mxu0 0
    %211 = vmatprep.subr.bf16.mxu0 0
    %212 = vmatpush1.bf16.msra.mxu0 0
    %213 = vmatprep.subr.bf16.mxu0 0
    %214 = vmatpush1.bf16.msra.mxu0 0
    %215 = vmatprep.subr.bf16.mxu0 0
    %216 = vmatpush1.bf16.msra.mxu0 0
    %217 = vmatprep.subr.bf16.mxu0 0
    %218 = vmatpush1.bf16.msra.mxu0 0
    %219 = vmatprep.subr.bf16.mxu0 %v203
    %220 = vmatpush1.bf16.msra.mxu0 %v200
    %221 = vmatprep.subr.bf16.mxu0 0
    %222 = vmatpush2.bf16.msra.mxu0 0
    %223 = vmatprep.subr.bf16.mxu0 0
    %224 = vmatpush2.bf16.msra.mxu0 0
    %225 = vmatprep.subr.bf16.mxu0 0
    %226 = vmatpush2.bf16.msra.mxu0 0
    %227 = vmatprep.subr.bf16.mxu0 0
    %228 = vmatpush2.bf16.msra.mxu0 0
    %229 = vmatprep.subr.bf16.mxu0 0
    %230 = vmatpush2.bf16.msra.mxu0 0
    %231 = vmatprep.subr.bf16.mxu0 0
    %232 = vmatpush2.bf16.msra.mxu0 0
    %233 = vmatprep.subr.bf16.mxu0 0
    %234 = vmatpush2.bf16.msra.mxu0 0
    %235 = vmatprep.subr.bf16.mxu0 0
    %236 = vmatpush2.bf16.msra.mxu0 0
    %237 = vmatprep.mubr.bf16.mxu0 0
    %238 = vmatmul.mubr.bf16.gmra.mxu0 %v187
    %v239 = vpop.f32.mrf.mxu0
    %v240 = vadd.f32 %v135, %v239
    %v241 = vpop.f32.mrf.mxu0
    %v242 = vadd.f32 %v135, %v241
    %v243 = vpop.f32.mrf.mxu0
    %v244 = vadd.f32 %v140, %v243
    %v245 = vpop.f32.mrf.mxu0
    %v246 = vadd.f32 %v140, %v245
    %247 = vmatprep.mubr.bf16.mxu0 0
    %248 = vmatmul.mubr.bf16.gmra.mxu0 %v190
    %v249 = vpop.f32.mrf.mxu0
    %v250 = vadd.f32 %v145, %v249
    %v251 = vpop.f32.mrf.mxu0
    %v252 = vadd.f32 %v145, %v251
    %v253 = vpop.f32.mrf.mxu0
    %v254 = vadd.f32 %v150, %v253
    %v255 = vpop.f32.mrf.mxu0
    %v256 = vadd.f32 %v150, %v255
    %257 = vmatprep.mubr.bf16.mxu0 0
    %258 = vmatmul.mubr.bf16.gmra.mxu0 %v193
    %v259 = vpop.f32.mrf.mxu0
    %v260 = vadd.f32 %v155, %v259
    %v261 = vpop.f32.mrf.mxu0
    %v262 = vadd.f32 %v155, %v261
    %v263 = vpop.f32.mrf.mxu0
    %v264 = vadd.f32 %v160, %v263
    %v265 = vpop.f32.mrf.mxu0
    %v266 = vadd.f32 %v160, %v265
    %267 = vmatprep.mubr.bf16.mxu0 0
    %268 = vmatmul.mubr.bf16.gmra.mxu0 %v196
    %v269 = vpop.f32.mrf.mxu0
    %v270 = vadd.f32 %v165, %v269
    %v271 = vpop.f32.mrf.mxu0
    %v272 = vadd.f32 %v165, %v271
    %v273 = vpop.f32.mrf.mxu0
    %v274 = vpop.f32.mrf.mxu0
    %275 = vdwg.mxu0
    %vm276 = vcmp.gt.f32.partialorder %v240, 0.0
    %vm277 = vcmp.gt.f32.partialorder %v242, 0.0
    %vm278 = vcmp.gt.f32.partialorder %v244, 0.0
    %vm279 = vcmp.gt.f32.partialorder %v246, 0.0
    %vm280 = vcmp.gt.f32.partialorder %v250, 0.0
    %vm281 = vcmp.gt.f32.partialorder %v252, 0.0
    %vm282 = vcmp.gt.f32.partialorder %v254, 0.0
    %vm283 = vcmp.gt.f32.partialorder %v256, 0.0
    %vm284 = vcmp.gt.f32.partialorder %v260, 0.0
    %vm285 = vcmp.gt.f32.partialorder %v262, 0.0
    %vm286 = vcmp.gt.f32.partialorder %v264, 0.0
    %vm287 = vcmp.gt.f32.partialorder %v266, 0.0
    %vm288 = vcmp.gt.f32.partialorder %v270, 0.0
    %vm289 = vcmp.gt.f32.partialorder %v272, 0.0
    %v290 = vmul.f32 %v240, 0.01
    %v291 = vmul.f32 %v242, 0.01
    %v292 = vmul.f32 %v244, 0.01
    %v293 = vmul.f32 %v246, 0.01
    %v294 = vmul.f32 %v250, 0.01
    %v295 = vmul.f32 %v252, 0.01
    %v296 = vmul.f32 %v254, 0.01
    %v297 = vmul.f32 %v256, 0.01
    %v298 = vmul.f32 %v260, 0.01
    %v299 = vmul.f32 %v262, 0.01
    %v300 = vmul.f32 %v264, 0.01
    %v301 = vmul.f32 %v266, 0.01
    %v302 = vmul.f32 %v270, 0.01
    %v303 = vmul.f32 %v272, 0.01
    %v304 = vsel %vm276, %v240, %v290
    %v305 = vsel %vm277, %v242, %v291
    %v306 = vsel %vm278, %v244, %v292
    %v307 = vsel %vm279, %v246, %v293
    %v308 = vsel %vm280, %v250, %v294
    %v309 = vsel %vm281, %v252, %v295
    %v310 = vsel %vm282, %v254, %v296
    %v311 = vsel %vm283, %v256, %v297
    %v312 = vsel %vm284, %v260, %v298
    %v313 = vsel %vm285, %v262, %v299
    %v314 = vsel %vm286, %v264, %v300
    %v315 = vsel %vm287, %v266, %v301
    %v316 = vsel %vm288, %v270, %v302
    %v317 = vsel %vm289, %v272, %v303
    %v318 = vld [vmem:[%s6] sm:$0xf]
    %v319 = vld [vmem:[%s6 + $0x4] sm:$0xf]
    %v320 = vld [vmem:[%s6 + $0x8] sm:$0xf]
    %v321 = vld [vmem:[%s6 + $0xc] sm:$0xf]
    %v322 = vld [vmem:[%s6 + $0x10] sm:$0xf]
    %v323 = vld [vmem:[%s6 + $0x14] sm:$0xf]
    %v324 = vld [vmem:[%s6 + $0x18] sm:$0xf]
    %v325 = vld [vmem:[%s6 + $0x1c] sm:$0xf]
    %v326 = vld [vmem:[%s6 + $0x20] sm:$0xf]
    %v327 = vld [vmem:[%s6 + $0x24] sm:$0xf]
    %v328 = vld [vmem:[%s6 + $0x28] sm:$0xf]
    %v329 = vld [vmem:[%s6 + $0x2c] sm:$0xf]
    %v330 = vld [vmem:[%s6 + $0x30] sm:$0xf]
    %v331 = vld [vmem:[%s6 + $0x34] sm:$0xf]
    %v332 = vld [vmem:[%s6 + $0x38] sm:$0xf]
    %v333 = vld [vmem:[%s6 + $0x3c] sm:$0xf]
    %v334 = vld [vmem:[%s6 + $0x40] sm:$0xf]
    %v335 = vld [vmem:[%s6 + $0x44] sm:$0xf]
    %v336 = vld [vmem:[%s6 + $0x48] sm:$0xf]
    %v337 = vld [vmem:[%s6 + $0x4c] sm:$0xf]
    %v338 = vld [vmem:[%s6 + $0x50] sm:$0xf]
    %v339 = vld [vmem:[%s6 + $0x54] sm:$0xf]
    %v340 = vld [vmem:[%s6 + $0x58] sm:$0xf]
    %v341 = vld [vmem:[%s6 + $0x5c] sm:$0xf]
    %v342 = vld [vmem:[%s6 + $0x60] sm:$0xf]
    %v343 = vld [vmem:[%s6 + $0x64] sm:$0xf]
    %v344 = vld [vmem:[%s6 + $0x68] sm:$0xf]
    %v345 = vld [vmem:[%s6 + $0x6c] sm:$0xf]
    %v346 = vld [vmem:[%s6 + $0x70] sm:$0xf]
    %v347 = vld [vmem:[%s6 + $0x74] sm:$0xf]
    %v348 = vld [vmem:[%s6 + $0x78] sm:$0xf]
    %v349 = vld [vmem:[%s6 + $0x7c] sm:$0xf]
    %v350 = vpack.c.bf16 %v306, %v304
    %v351 = vpack.c.bf16 %v307, %v305
    %v352 = vpack.c.bf16 %v310, %v308
    %v353 = vpack.c.bf16 %v311, %v309
    %v354 = vpack.c.bf16 %v314, %v312
    %v355 = vpack.c.bf16 %v315, %v313
    %v356 = vpack.c.bf16 %v316, %v316
    %v357 = vpack.c.bf16 %v317, %v317
    %v358 = vld [vmem:[%s7] sm:$0xff]
    %v359 = vld [vmem:[%s7 + $0x8] sm:$0xff]
    %v360 = vld [vmem:[%s7 + $0x10] sm:$0xff]
    %v361 = vld [vmem:[%s7 + $0x18] sm:$0xff]
    %v362 = vld [vmem:[%s7 + $0x20] sm:$0xff]
    %v363 = vld [vmem:[%s7 + $0x28] sm:$0xff]
    %v364 = vld [vmem:[%s7 + $0x30] sm:$0xff]
    %v365 = vld [vmem:[%s7 + $0x38] sm:$0xff]
    %v366 = vld [vmem:[%s7 + $0x40] sm:$0xff]
    %v367 = vld [vmem:[%s7 + $0x48] sm:$0xff]
    %v368 = vld [vmem:[%s7 + $0x50] sm:$0xff]
    %v369 = vld [vmem:[%s7 + $0x58] sm:$0xff]
    %v370 = vld [vmem:[%s7 + $0x60] sm:$0xff]
    %v371 = vld [vmem:[%s7 + $0x68] sm:$0xff]
    %v372 = vld [vmem:[%s7 + $0x70] sm:$0xff]
    %v373 = vld [vmem:[%s7 + $0x78] sm:$0xff]
    %v374 = vld [vmem:[%s7 + $0x80] sm:$0xff]
    %v375 = vld [vmem:[%s7 + $0x88] sm:$0xff]
    %v376 = vld [vmem:[%s7 + $0x90] sm:$0xff]
    %v377 = vld [vmem:[%s7 + $0x98] sm:$0xff]
    %v378 = vld [vmem:[%s7 + $0xa0] sm:$0xff]
    %v379 = vld [vmem:[%s7 + $0xa8] sm:$0xff]
    %v380 = vld [vmem:[%s7 + $0xb0] sm:$0xff]
    %v381 = vld [vmem:[%s7 + $0xb8] sm:$0xff]
    %v382 = vld [vmem:[%s7 + $0xc0] sm:$0xff]
    %v383 = vld [vmem:[%s7 + $0xc8] sm:$0xff]
    %v384 = vld [vmem:[%s7 + $0xd0] sm:$0xff]
    %v385 = vld [vmem:[%s7 + $0xd8] sm:$0xff]
    %v386 = vld [vmem:[%s7 + $0xe0] sm:$0xff]
    %v387 = vld [vmem:[%s7 + $0xe8] sm:$0xff]
    %v388 = vld [vmem:[%s7 + $0xf0] sm:$0xff]
    %v389 = vld [vmem:[%s7 + $0xf8] sm:$0xff]
    %391 = vset.pattern.permute.xlu0 0
    %392 = vperm.xlu0 %391, %v358
    %v393 = vpop.permute.xlu0 %392
    %396 = vset.pattern.permute.xlu0 0
    %397 = vperm.xlu0 %396, %v359
    %v398 = vpop.permute.xlu0 %397
    %401 = vset.pattern.permute.xlu0 0
    %402 = vperm.xlu0 %401, %v360
    %v403 = vpop.permute.xlu0 %402
    %406 = vset.pattern.permute.xlu0 0
    %407 = vperm.xlu0 %406, %v361
    %v408 = vpop.permute.xlu0 %407
    %411 = vset.pattern.permute.xlu0 0
    %412 = vperm.xlu0 %411, %v362
    %v413 = vpop.permute.xlu0 %412
    %416 = vset.pattern.permute.xlu0 0
    %417 = vperm.xlu0 %416, %v363
    %v418 = vpop.permute.xlu0 %417
    %421 = vset.pattern.permute.xlu0 0
    %422 = vperm.xlu0 %421, %v364
    %v423 = vpop.permute.xlu0 %422
    %426 = vset.pattern.permute.xlu0 0
    %427 = vperm.xlu0 %426, %v365
    %v428 = vpop.permute.xlu0 %427
    %431 = vset.pattern.permute.xlu0 0
    %432 = vperm.xlu0 %431, %v366
    %v433 = vpop.permute.xlu0 %432
    %436 = vset.pattern.permute.xlu0 0
    %437 = vperm.xlu0 %436, %v367
    %v438 = vpop.permute.xlu0 %437
    %441 = vset.pattern.permute.xlu0 0
    %442 = vperm.xlu0 %441, %v368
    %v443 = vpop.permute.xlu0 %442
    %446 = vset.pattern.permute.xlu0 0
    %447 = vperm.xlu0 %446, %v369
    %v448 = vpop.permute.xlu0 %447
    %451 = vset.pattern.permute.xlu0 0
    %452 = vperm.xlu0 %451, %v370
    %v453 = vpop.permute.xlu0 %452
    %456 = vset.pattern.permute.xlu0 0
    %457 = vperm.xlu0 %456, %v371
    %v458 = vpop.permute.xlu0 %457
    %461 = vset.pattern.permute.xlu0 0
    %462 = vperm.xlu0 %461, %v372
    %v463 = vpop.permute.xlu0 %462
    %466 = vset.pattern.permute.xlu0 0
    %467 = vperm.xlu0 %466, %v373
    %v468 = vpop.permute.xlu0 %467
    %471 = vset.pattern.permute.xlu0 0
    %472 = vperm.xlu0 %471, %v374
    %v473 = vpop.permute.xlu0 %472
    %476 = vset.pattern.permute.xlu0 0
    %477 = vperm.xlu0 %476, %v375
    %v478 = vpop.permute.xlu0 %477
    %481 = vset.pattern.permute.xlu0 0
    %482 = vperm.xlu0 %481, %v376
    %v483 = vpop.permute.xlu0 %482
    %486 = vset.pattern.permute.xlu0 0
    %487 = vperm.xlu0 %486, %v377
    %v488 = vpop.permute.xlu0 %487
    %491 = vset.pattern.permute.xlu0 0
    %492 = vperm.xlu0 %491, %v378
    %v493 = vpop.permute.xlu0 %492
    %496 = vset.pattern.permute.xlu0 0
    %497 = vperm.xlu0 %496, %v379
    %v498 = vpop.permute.xlu0 %497
    %501 = vset.pattern.permute.xlu0 0
    %502 = vperm.xlu0 %501, %v380
    %v503 = vpop.permute.xlu0 %502
    %506 = vset.pattern.permute.xlu0 0
    %507 = vperm.xlu0 %506, %v381
    %v508 = vpop.permute.xlu0 %507
    %511 = vset.pattern.permute.xlu0 0
    %512 = vperm.xlu0 %511, %v382
    %v513 = vpop.permute.xlu0 %512
    %516 = vset.pattern.permute.xlu0 0
    %517 = vperm.xlu0 %516, %v383
    %v518 = vpop.permute.xlu0 %517
    %521 = vset.pattern.permute.xlu0 0
    %522 = vperm.xlu0 %521, %v384
    %v523 = vpop.permute.xlu0 %522
    %526 = vset.pattern.permute.xlu0 0
    %527 = vperm.xlu0 %526, %v385
    %v528 = vpop.permute.xlu0 %527
    %531 = vset.pattern.permute.xlu0 0
    %532 = vperm.xlu0 %531, %v386
    %v533 = vpop.permute.xlu0 %532
    %536 = vset.pattern.permute.xlu0 0
    %537 = vperm.xlu0 %536, %v387
    %v538 = vpop.permute.xlu0 %537
    %541 = vset.pattern.permute.xlu0 0
    %542 = vperm.xlu0 %541, %v388
    %v543 = vpop.permute.xlu0 %542
    %546 = vset.pattern.permute.xlu0 0
    %547 = vperm.xlu0 %546, %v389
    %v548 = vpop.permute.xlu0 %547
    %v582 = vunpack.c.l.b16 %v318
    %v583 = vunpack.c.l.b16 %v319
    %v584 = vunpack.c.l.b16 %v320
    %v585 = vunpack.c.l.b16 %v321
    %v586 = vunpack.c.l.b16 %v322
    %v587 = vunpack.c.l.b16 %v323
    %v588 = vunpack.c.l.b16 %v324
    %v589 = vunpack.c.l.b16 %v325
    %v590 = vunpack.c.l.b16 %v326
    %v591 = vunpack.c.l.b16 %v327
    %v592 = vunpack.c.l.b16 %v328
    %v593 = vunpack.c.l.b16 %v329
    %v594 = vunpack.c.l.b16 %v330
    %v595 = vunpack.c.l.b16 %v331
    %v596 = vunpack.c.l.b16 %v332
    %v597 = vunpack.c.l.b16 %v333
    %v598 = vunpack.c.l.b16 %v334
    %v599 = vunpack.c.l.b16 %v335
    %v600 = vunpack.c.l.b16 %v336
    %v601 = vunpack.c.l.b16 %v337
    %v602 = vunpack.c.l.b16 %v338
    %v603 = vunpack.c.l.b16 %v339
    %v604 = vunpack.c.l.b16 %v340
    %v605 = vunpack.c.l.b16 %v341
    %v606 = vunpack.c.l.b16 %v342
    %v607 = vunpack.c.l.b16 %v343
    %v608 = vunpack.c.l.b16 %v344
    %v609 = vunpack.c.l.b16 %v345
    %v610 = vunpack.c.l.b16 %v346
    %v611 = vunpack.c.l.b16 %v347
    %v612 = vunpack.c.l.b16 %v348
    %v613 = vunpack.c.l.b16 %v349
    %v614 = vpack.c.b16 %v583, %v582
    %v615 = vpack.c.b16 %v585, %v584
    %v616 = vpack.c.b16 %v587, %v586
    %v617 = vpack.c.b16 %v589, %v588
    %v618 = vpack.c.b16 %v591, %v590
    %v619 = vpack.c.b16 %v593, %v592
    %v620 = vpack.c.b16 %v595, %v594
    %v621 = vpack.c.b16 %v597, %v596
    %v622 = vpack.c.b16 %v599, %v598
    %v623 = vpack.c.b16 %v601, %v600
    %v624 = vpack.c.b16 %v603, %v602
    %v625 = vpack.c.b16 %v605, %v604
    %v626 = vpack.c.b16 %v607, %v606
    %v627 = vpack.c.b16 %v609, %v608
    %v628 = vpack.c.b16 %v611, %v610
    %v629 = vpack.c.b16 %v613, %v612
    %vm630 = vcmask 408576
    %v632 = vsel %vm630, %v614, 0
    %v635 = vsel %vm630, %v615, 0
    %v638 = vsel %vm630, %v616, 0
    %v641 = vsel %vm630, %v617, 0
    %v644 = vsel %vm630, %v618, 0
    %v647 = vsel %vm630, %v619, 0
    %v650 = vsel %vm630, %v620, 0
    %v653 = vsel %vm630, %v621, 0
    %v656 = vsel %vm630, %v622, 0
    %v659 = vsel %vm630, %v623, 0
    %v662 = vsel %vm630, %v624, 0
    %v665 = vsel %vm630, %v625, 0
    %v668 = vsel %vm630, %v626, 0
    %v671 = vsel %vm630, %v627, 0
    %v674 = vsel %vm630, %v628, 0
    %v677 = vsel %vm630, %v629, 0
    %vm679 = vcmask 1040384
    %v681 = vsel %vm679, %v356, 0
    %v684 = vsel %vm679, %v357, 0
    %686 = vmatprep.subr.bf16.mxu0 0
    %687 = vmatpush1.bf16.msra.mxu0 0
    %688 = vmatprep.subr.bf16.mxu0 0
    %689 = vmatpush1.bf16.msra.mxu0 0
    %690 = vmatprep.subr.bf16.mxu0 0
    %691 = vmatpush1.bf16.msra.mxu0 0
    %692 = vmatprep.subr.bf16.mxu0 0
    %693 = vmatpush1.bf16.msra.mxu0 0
    %694 = vmatprep.subr.bf16.mxu0 %v684
    %695 = vmatpush1.bf16.msra.mxu0 %v681
    %696 = vmatprep.subr.bf16.mxu0 %v355
    %697 = vmatpush1.bf16.msra.mxu0 %v354
    %698 = vmatprep.subr.bf16.mxu0 %v353
    %699 = vmatpush1.bf16.msra.mxu0 %v352
    %700 = vmatprep.subr.bf16.mxu0 %v351
    %701 = vmatpush1.bf16.msra.mxu0 %v350
    %702 = vmatprep.subr.bf16.mxu0 0
    %703 = vmatpush2.bf16.msra.mxu0 0
    %704 = vmatprep.subr.bf16.mxu0 0
    %705 = vmatpush2.bf16.msra.mxu0 0
    %706 = vmatprep.subr.bf16.mxu0 0
    %707 = vmatpush2.bf16.msra.mxu0 0
    %708 = vmatprep.subr.bf16.mxu0 0
    %709 = vmatpush2.bf16.msra.mxu0 0
    %710 = vmatprep.subr.bf16.mxu0 0
    %711 = vmatpush2.bf16.msra.mxu0 0
    %712 = vmatprep.subr.bf16.mxu0 0
    %713 = vmatpush2.bf16.msra.mxu0 0
    %714 = vmatprep.subr.bf16.mxu0 0
    %715 = vmatpush2.bf16.msra.mxu0 0
    %716 = vmatprep.subr.bf16.mxu0 0
    %717 = vmatpush2.bf16.msra.mxu0 0
    %718 = vmatprep.mubr.bf16.mxu0 0
    %719 = vmatmul.mubr.bf16.gmra.mxu0 %v632
    %v720 = vpop.f32.mrf.mxu0
    %v721 = vadd.f32 %v393, %v720
    %v722 = vpop.f32.mrf.mxu0
    %v723 = vadd.f32 %v393, %v722
    %v724 = vpop.f32.mrf.mxu0
    %v725 = vadd.f32 %v398, %v724
    %v726 = vpop.f32.mrf.mxu0
    %v727 = vadd.f32 %v398, %v726
    %728 = vmatprep.mubr.bf16.mxu0 0
    %729 = vmatmul.mubr.bf16.gmra.mxu0 %v635
    %v730 = vpop.f32.mrf.mxu0
    %v731 = vadd.f32 %v403, %v730
    %v732 = vpop.f32.mrf.mxu0
    %v733 = vadd.f32 %v403, %v732
    %v734 = vpop.f32.mrf.mxu0
    %v735 = vadd.f32 %v408, %v734
    %v736 = vpop.f32.mrf.mxu0
    %v737 = vadd.f32 %v408, %v736
    %738 = vmatprep.mubr.bf16.mxu0 0
    %739 = vmatmul.mubr.bf16.gmra.mxu0 %v638
    %v740 = vpop.f32.mrf.mxu0
    %v741 = vadd.f32 %v413, %v740
    %v742 = vpop.f32.mrf.mxu0
    %v743 = vadd.f32 %v413, %v742
    %v744 = vpop.f32.mrf.mxu0
    %v745 = vadd.f32 %v418, %v744
    %v746 = vpop.f32.mrf.mxu0
    %v747 = vadd.f32 %v418, %v746
    %748 = vmatprep.mubr.bf16.mxu0 0
    %749 = vmatmul.mubr.bf16.gmra.mxu0 %v641
    %v750 = vpop.f32.mrf.mxu0
    %v751 = vadd.f32 %v423, %v750
    %v752 = vpop.f32.mrf.mxu0
    %v753 = vadd.f32 %v423, %v752
    %v754 = vpop.f32.mrf.mxu0
    %v755 = vadd.f32 %v428, %v754
    %v756 = vpop.f32.mrf.mxu0
    %v757 = vadd.f32 %v428, %v756
    %758 = vmatprep.mubr.bf16.mxu0 0
    %759 = vmatmul.mubr.bf16.gmra.mxu0 %v644
    %v760 = vpop.f32.mrf.mxu0
    %v761 = vadd.f32 %v433, %v760
    %v762 = vpop.f32.mrf.mxu0
    %v763 = vadd.f32 %v433, %v762
    %v764 = vpop.f32.mrf.mxu0
    %v765 = vadd.f32 %v438, %v764
    %v766 = vpop.f32.mrf.mxu0
    %v767 = vadd.f32 %v438, %v766
    %768 = vmatprep.mubr.bf16.mxu0 0
    %769 = vmatmul.mubr.bf16.gmra.mxu0 %v647
    %v770 = vpop.f32.mrf.mxu0
    %v771 = vadd.f32 %v443, %v770
    %v772 = vpop.f32.mrf.mxu0
    %v773 = vadd.f32 %v443, %v772
    %v774 = vpop.f32.mrf.mxu0
    %v775 = vadd.f32 %v448, %v774
    %v776 = vpop.f32.mrf.mxu0
    %v777 = vadd.f32 %v448, %v776
    %778 = vmatprep.mubr.bf16.mxu0 0
    %779 = vmatmul.mubr.bf16.gmra.mxu0 %v650
    %v780 = vpop.f32.mrf.mxu0
    %v781 = vadd.f32 %v453, %v780
    %v782 = vpop.f32.mrf.mxu0
    %v783 = vadd.f32 %v453, %v782
    %v784 = vpop.f32.mrf.mxu0
    %v785 = vadd.f32 %v458, %v784
    %v786 = vpop.f32.mrf.mxu0
    %v787 = vadd.f32 %v458, %v786
    %788 = vmatprep.mubr.bf16.mxu0 0
    %789 = vmatmul.mubr.bf16.gmra.mxu0 %v653
    %v790 = vpop.f32.mrf.mxu0
    %v791 = vadd.f32 %v463, %v790
    %v792 = vpop.f32.mrf.mxu0
    %v793 = vadd.f32 %v463, %v792
    %v794 = vpop.f32.mrf.mxu0
    %v795 = vadd.f32 %v468, %v794
    %v796 = vpop.f32.mrf.mxu0
    %v797 = vadd.f32 %v468, %v796
    %798 = vmatprep.mubr.bf16.mxu0 0
    %799 = vmatmul.mubr.bf16.gmra.mxu0 %v656
    %v800 = vpop.f32.mrf.mxu0
    %v801 = vadd.f32 %v473, %v800
    %v802 = vpop.f32.mrf.mxu0
    %v803 = vadd.f32 %v473, %v802
    %v804 = vpop.f32.mrf.mxu0
    %v805 = vadd.f32 %v478, %v804
    %v806 = vpop.f32.mrf.mxu0
    %v807 = vadd.f32 %v478, %v806
    %808 = vmatprep.mubr.bf16.mxu0 0
    %809 = vmatmul.mubr.bf16.gmra.mxu0 %v659
    %v810 = vpop.f32.mrf.mxu0
    %v811 = vadd.f32 %v483, %v810
    %v812 = vpop.f32.mrf.mxu0
    %v813 = vadd.f32 %v483, %v812
    %v814 = vpop.f32.mrf.mxu0
    %v815 = vadd.f32 %v488, %v814
    %v816 = vpop.f32.mrf.mxu0
    %v817 = vadd.f32 %v488, %v816
    %818 = vmatprep.mubr.bf16.mxu0 0
    %819 = vmatmul.mubr.bf16.gmra.mxu0 %v662
    %v820 = vpop.f32.mrf.mxu0
    %v821 = vadd.f32 %v493, %v820
    %v822 = vpop.f32.mrf.mxu0
    %v823 = vadd.f32 %v493, %v822
    %v824 = vpop.f32.mrf.mxu0
    %v825 = vadd.f32 %v498, %v824
    %v826 = vpop.f32.mrf.mxu0
    %v827 = vadd.f32 %v498, %v826
    %828 = vmatprep.mubr.bf16.mxu0 0
    %829 = vmatmul.mubr.bf16.gmra.mxu0 %v665
    %v830 = vpop.f32.mrf.mxu0
    %v831 = vadd.f32 %v503, %v830
    %v832 = vpop.f32.mrf.mxu0
    %v833 = vadd.f32 %v503, %v832
    %v834 = vpop.f32.mrf.mxu0
    %v835 = vadd.f32 %v508, %v834
    %v836 = vpop.f32.mrf.mxu0
    %v837 = vadd.f32 %v508, %v836
    %838 = vmatprep.mubr.bf16.mxu0 0
    %839 = vmatmul.mubr.bf16.gmra.mxu0 %v668
    %v840 = vpop.f32.mrf.mxu0
    %v841 = vadd.f32 %v513, %v840
    %v842 = vpop.f32.mrf.mxu0
    %v843 = vadd.f32 %v513, %v842
    %v844 = vpop.f32.mrf.mxu0
    %v845 = vadd.f32 %v518, %v844
    %v846 = vpop.f32.mrf.mxu0
    %v847 = vadd.f32 %v518, %v846
    %848 = vmatprep.mubr.bf16.mxu0 0
    %849 = vmatmul.mubr.bf16.gmra.mxu0 %v671
    %v850 = vpop.f32.mrf.mxu0
    %v851 = vadd.f32 %v523, %v850
    %v852 = vpop.f32.mrf.mxu0
    %v853 = vadd.f32 %v523, %v852
    %v854 = vpop.f32.mrf.mxu0
    %v855 = vadd.f32 %v528, %v854
    %v856 = vpop.f32.mrf.mxu0
    %v857 = vadd.f32 %v528, %v856
    %858 = vmatprep.mubr.bf16.mxu0 0
    %859 = vmatmul.mubr.bf16.gmra.mxu0 %v674
    %v860 = vpop.f32.mrf.mxu0
    %v861 = vadd.f32 %v533, %v860
    %v862 = vpop.f32.mrf.mxu0
    %v863 = vadd.f32 %v533, %v862
    %v864 = vpop.f32.mrf.mxu0
    %v865 = vadd.f32 %v538, %v864
    %v866 = vpop.f32.mrf.mxu0
    %v867 = vadd.f32 %v538, %v866
    %868 = vmatprep.mubr.bf16.mxu0 0
    %869 = vmatmul.mubr.bf16.gmra.mxu0 %v677
    %v870 = vpop.f32.mrf.mxu0
    %v871 = vadd.f32 %v543, %v870
    %v872 = vpop.f32.mrf.mxu0
    %v873 = vadd.f32 %v543, %v872
    %v874 = vpop.f32.mrf.mxu0
    %v875 = vadd.f32 %v548, %v874
    %v876 = vpop.f32.mrf.mxu0
    %v877 = vadd.f32 %v548, %v876
    %878 = vdwg.mxu0
    %v879 = vld [vmem:[%s1] sm:$0xff]
    %v880 = vld [vmem:[%s1 + $0x8] sm:$0xff]
    %v881 = vld [vmem:[%s1 + $0x10] sm:$0xff]
    %v882 = vld [vmem:[%s1 + $0x18] sm:$0xff]
    %v883 = vld [vmem:[%s1 + $0x20] sm:$0xff]
    %v884 = vld [vmem:[%s1 + $0x28] sm:$0xff]
    %v885 = vld [vmem:[%s1 + $0x30] sm:$0xff]
    %v886 = vld [vmem:[%s1 + $0x38] sm:$0xff]
    %v887 = vld [vmem:[%s1 + $0x40] sm:$0xff]
    %v888 = vld [vmem:[%s1 + $0x48] sm:$0xff]
    %v889 = vld [vmem:[%s1 + $0x50] sm:$0xff]
    %v890 = vld [vmem:[%s1 + $0x58] sm:$0xff]
    %v891 = vld [vmem:[%s1 + $0x60] sm:$0xff]
    %v892 = vld [vmem:[%s1 + $0x68] sm:$0xff]
    %v893 = vld [vmem:[%s1 + $0x70] sm:$0xff]
    %v894 = vld [vmem:[%s1 + $0x78] sm:$0xff]
    %v895 = vld [vmem:[%s1 + $0x80] sm:$0xff]
    %v896 = vld [vmem:[%s1 + $0x88] sm:$0xff]
    %v897 = vld [vmem:[%s1 + $0x90] sm:$0xff]
    %v898 = vld [vmem:[%s1 + $0x98] sm:$0xff]
    %v899 = vld [vmem:[%s1 + $0xa0] sm:$0xff]
    %v900 = vld [vmem:[%s1 + $0xa8] sm:$0xff]
    %v901 = vld [vmem:[%s1 + $0xb0] sm:$0xff]
    %v902 = vld [vmem:[%s1 + $0xb8] sm:$0xff]
    %v903 = vld [vmem:[%s1 + $0xc0] sm:$0xff]
    %v904 = vld [vmem:[%s1 + $0xc8] sm:$0xff]
    %v905 = vld [vmem:[%s1 + $0xd0] sm:$0xff]
    %v906 = vld [vmem:[%s1 + $0xd8] sm:$0xff]
    %v907 = vld [vmem:[%s1 + $0xe0] sm:$0xff]
    %v908 = vld [vmem:[%s1 + $0xe8] sm:$0xff]
    %v909 = vld [vmem:[%s1 + $0xf0] sm:$0xff]
    %v910 = vld [vmem:[%s1 + $0xf8] sm:$0xff]
    %v911 = vmul.f32 %v801, 0.5
    %v912 = vmul.f32 %v803, 0.5
    %v913 = vmul.f32 %v805, 0.5
    %v914 = vmul.f32 %v807, 0.5
    %v915 = vmul.f32 %v811, 0.5
    %v916 = vmul.f32 %v813, 0.5
    %v917 = vmul.f32 %v815, 0.5
    %v918 = vmul.f32 %v817, 0.5
    %v919 = vmul.f32 %v821, 0.5
    %v920 = vmul.f32 %v823, 0.5
    %v921 = vmul.f32 %v825, 0.5
    %v922 = vmul.f32 %v827, 0.5
    %v923 = vmul.f32 %v831, 0.5
    %v924 = vmul.f32 %v833, 0.5
    %v925 = vmul.f32 %v835, 0.5
    %v926 = vmul.f32 %v837, 0.5
    %v927 = vmul.f32 %v841, 0.5
    %v928 = vmul.f32 %v843, 0.5
    %v929 = vmul.f32 %v845, 0.5
    %v930 = vmul.f32 %v847, 0.5
    %v931 = vmul.f32 %v851, 0.5
    %v932 = vmul.f32 %v853, 0.5
    %v933 = vmul.f32 %v855, 0.5
    %v934 = vmul.f32 %v857, 0.5
    %v935 = vmul.f32 %v861, 0.5
    %v936 = vmul.f32 %v863, 0.5
    %v937 = vmul.f32 %v865, 0.5
    %v938 = vmul.f32 %v867, 0.5
    %v939 = vmul.f32 %v871, 0.5
    %v940 = vmul.f32 %v873, 0.5
    %v941 = vmul.f32 %v875, 0.5
    %v942 = vmul.f32 %v877, 0.5
    %v943 = vmul.f32 %v911, 1.442695
    %v944 = vpow.pop %v943
    %v945 = vmul.f32 %v912, 1.442695
    %v946 = vpow.pop %v945
    %v947 = vmul.f32 %v913, 1.442695
    %v948 = vpow.pop %v947
    %v949 = vmul.f32 %v914, 1.442695
    %v950 = vpow.pop %v949
    %v951 = vmul.f32 %v915, 1.442695
    %v952 = vpow.pop %v951
    %v953 = vmul.f32 %v916, 1.442695
    %v954 = vpow.pop %v953
    %v955 = vmul.f32 %v917, 1.442695
    %v956 = vpow.pop %v955
    %v957 = vmul.f32 %v918, 1.442695
    %v958 = vpow.pop %v957
    %v959 = vmul.f32 %v919, 1.442695
    %v960 = vpow.pop %v959
    %v961 = vmul.f32 %v920, 1.442695
    %v962 = vpow.pop %v961
    %v963 = vmul.f32 %v921, 1.442695
    %v964 = vpow.pop %v963
    %v965 = vmul.f32 %v922, 1.442695
    %v966 = vpow.pop %v965
    %v967 = vmul.f32 %v923, 1.442695
    %v968 = vpow.pop %v967
    %v969 = vmul.f32 %v924, 1.442695
    %v970 = vpow.pop %v969
    %v971 = vmul.f32 %v925, 1.442695
    %v972 = vpow.pop %v971
    %v973 = vmul.f32 %v926, 1.442695
    %v974 = vpow.pop %v973
    %v975 = vmul.f32 %v927, 1.442695
    %v976 = vpow.pop %v975
    %v977 = vmul.f32 %v928, 1.442695
    %v978 = vpow.pop %v977
    %v979 = vmul.f32 %v929, 1.442695
    %v980 = vpow.pop %v979
    %v981 = vmul.f32 %v930, 1.442695
    %v982 = vpow.pop %v981
    %v983 = vmul.f32 %v931, 1.442695
    %v984 = vpow.pop %v983
    %v985 = vmul.f32 %v932, 1.442695
    %v986 = vpow.pop %v985
    %v987 = vmul.f32 %v933, 1.442695
    %v988 = vpow.pop %v987
    %v989 = vmul.f32 %v934, 1.442695
    %v990 = vpow.pop %v989
    %v991 = vmul.f32 %v935, 1.442695
    %v992 = vpow.pop %v991
    %v993 = vmul.f32 %v936, 1.442695
    %v994 = vpow.pop %v993
    %v995 = vmul.f32 %v937, 1.442695
    %v996 = vpow.pop %v995
    %v997 = vmul.f32 %v938, 1.442695
    %v998 = vpow.pop %v997
    %v999 = vmul.f32 %v939, 1.442695
    %v1000 = vpow.pop %v999
    %v1001 = vmul.f32 %v940, 1.442695
    %v1002 = vpow.pop %v1001
    %v1003 = vmul.f32 %v941, 1.442695
    %v1004 = vpow.pop %v1003
    %v1005 = vmul.f32 %v942, 1.442695
    %v1006 = vpow.pop %v1005
    %v1007 = vmul.f32 %v879, %v944
    %v1008 = vmul.f32 %v880, %v946
    %v1009 = vmul.f32 %v881, %v948
    %v1010 = vmul.f32 %v882, %v950
    %v1011 = vmul.f32 %v883, %v952
    %v1012 = vmul.f32 %v884, %v954
    %v1013 = vmul.f32 %v885, %v956
    %v1014 = vmul.f32 %v886, %v958
    %v1015 = vmul.f32 %v887, %v960
    %v1016 = vmul.f32 %v888, %v962
    %v1017 = vmul.f32 %v889, %v964
    %v1018 = vmul.f32 %v890, %v966
    %v1019 = vmul.f32 %v891, %v968
    %v1020 = vmul.f32 %v892, %v970
    %v1021 = vmul.f32 %v893, %v972
    %v1022 = vmul.f32 %v894, %v974
    %v1023 = vmul.f32 %v895, %v976
    %v1024 = vmul.f32 %v896, %v978
    %v1025 = vmul.f32 %v897, %v980
    %v1026 = vmul.f32 %v898, %v982
    %v1027 = vmul.f32 %v899, %v984
    %v1028 = vmul.f32 %v900, %v986
    %v1029 = vmul.f32 %v901, %v988
    %v1030 = vmul.f32 %v902, %v990
    %v1031 = vmul.f32 %v903, %v992
    %v1032 = vmul.f32 %v904, %v994
    %v1033 = vmul.f32 %v905, %v996
    %v1034 = vmul.f32 %v906, %v998
    %v1035 = vmul.f32 %v907, %v1000
    %v1036 = vmul.f32 %v908, %v1002
    %v1037 = vmul.f32 %v909, %v1004
    %v1038 = vmul.f32 %v910, %v1006
    %v1039 = vadd.f32 %v721, %v1007
    %v1040 = vadd.f32 %v723, %v1008
    %v1041 = vadd.f32 %v725, %v1009
    %v1042 = vadd.f32 %v727, %v1010
    %v1043 = vadd.f32 %v731, %v1011
    %v1044 = vadd.f32 %v733, %v1012
    %v1045 = vadd.f32 %v735, %v1013
    %v1046 = vadd.f32 %v737, %v1014
    %v1047 = vadd.f32 %v741, %v1015
    %v1048 = vadd.f32 %v743, %v1016
    %v1049 = vadd.f32 %v745, %v1017
    %v1050 = vadd.f32 %v747, %v1018
    %v1051 = vadd.f32 %v751, %v1019
    %v1052 = vadd.f32 %v753, %v1020
    %v1053 = vadd.f32 %v755, %v1021
    %v1054 = vadd.f32 %v757, %v1022
    %v1055 = vadd.f32 %v761, %v1023
    %v1056 = vadd.f32 %v763, %v1024
    %v1057 = vadd.f32 %v765, %v1025
    %v1058 = vadd.f32 %v767, %v1026
    %v1059 = vadd.f32 %v771, %v1027
    %v1060 = vadd.f32 %v773, %v1028
    %v1061 = vadd.f32 %v775, %v1029
    %v1062 = vadd.f32 %v777, %v1030
    %v1063 = vadd.f32 %v781, %v1031
    %v1064 = vadd.f32 %v783, %v1032
    %v1065 = vadd.f32 %v785, %v1033
    %v1066 = vadd.f32 %v787, %v1034
    %v1067 = vadd.f32 %v791, %v1035
    %v1068 = vadd.f32 %v793, %v1036
    %v1069 = vadd.f32 %v795, %v1037
    %v1070 = vadd.f32 %v797, %v1038
    %v1071 = vld [vmem:[%s8] sm:$0xf]
    %v1072 = vld [vmem:[%s8 + $0x4] sm:$0xf]
    %v1073 = vld [vmem:[%s8 + $0x8] sm:$0xf]
    %v1074 = vld [vmem:[%s8 + $0xc] sm:$0xf]
    %v1075 = vld [vmem:[%s8 + $0x10] sm:$0xf]
    %v1076 = vld [vmem:[%s8 + $0x14] sm:$0xf]
    %v1077 = vld [vmem:[%s8 + $0x18] sm:$0xf]
    %v1078 = vld [vmem:[%s8 + $0x1c] sm:$0xf]
    %v1079 = vld [vmem:[%s8 + $0x20] sm:$0xf]
    %v1080 = vld [vmem:[%s8 + $0x24] sm:$0xf]
    %v1081 = vld [vmem:[%s8 + $0x28] sm:$0xf]
    %v1082 = vld [vmem:[%s8 + $0x2c] sm:$0xf]
    %v1083 = vld [vmem:[%s8 + $0x30] sm:$0xf]
    %v1084 = vld [vmem:[%s8 + $0x34] sm:$0xf]
    %v1085 = vld [vmem:[%s8 + $0x38] sm:$0xf]
    %v1086 = vld [vmem:[%s8 + $0x3c] sm:$0xf]
    %v1087 = vld [vmem:[%s8 + $0x40] sm:$0xf]
    %v1088 = vld [vmem:[%s8 + $0x44] sm:$0xf]
    %v1089 = vld [vmem:[%s8 + $0x48] sm:$0xf]
    %v1090 = vld [vmem:[%s8 + $0x4c] sm:$0xf]
    %v1091 = vld [vmem:[%s8 + $0x50] sm:$0xf]
    %v1092 = vld [vmem:[%s8 + $0x54] sm:$0xf]
    %v1093 = vld [vmem:[%s8 + $0x58] sm:$0xf]
    %v1094 = vld [vmem:[%s8 + $0x5c] sm:$0xf]
    %v1095 = vld [vmem:[%s8 + $0x60] sm:$0xf]
    %v1096 = vpack.c.bf16 %v1041, %v1039
    %v1097 = vpack.c.bf16 %v1042, %v1040
    %v1098 = vpack.c.bf16 %v1045, %v1043
    %v1099 = vpack.c.bf16 %v1046, %v1044
    %v1100 = vpack.c.bf16 %v1049, %v1047
    %v1101 = vpack.c.bf16 %v1050, %v1048
    %v1102 = vpack.c.bf16 %v1053, %v1051
    %v1103 = vpack.c.bf16 %v1054, %v1052
    %v1104 = vpack.c.bf16 %v1057, %v1055
    %v1105 = vpack.c.bf16 %v1058, %v1056
    %v1106 = vpack.c.bf16 %v1061, %v1059
    %v1107 = vpack.c.bf16 %v1062, %v1060
    %v1108 = vpack.c.bf16 %v1065, %v1063
    %v1109 = vpack.c.bf16 %v1066, %v1064
    %v1110 = vpack.c.bf16 %v1069, %v1067
    %v1111 = vpack.c.bf16 %v1070, %v1068
    %v1112 = vld [vmem:[%s9] sm:$0xff]
    %v1113 = vld [vmem:[%s9 + $0x8] sm:$0xff]
    %v1114 = vld [vmem:[%s9 + $0x10] sm:$0xff]
    %v1115 = vld [vmem:[%s9 + $0x18] sm:$0xff]
    %v1116 = vld [vmem:[%s9 + $0x20] sm:$0xff]
    %v1117 = vld [vmem:[%s9 + $0x28] sm:$0xff]
    %v1118 = vld [vmem:[%s9 + $0x30] sm:$0xff]
    %v1119 = vld [vmem:[%s9 + $0x38] sm:$0xff]
    %v1120 = vld [vmem:[%s9 + $0x40] sm:$0xff]
    %v1121 = vld [vmem:[%s9 + $0x48] sm:$0xff]
    %v1122 = vld [vmem:[%s9 + $0x50] sm:$0xff]
    %v1123 = vld [vmem:[%s9 + $0x58] sm:$0xff]
    %v1124 = vld [vmem:[%s9 + $0x60] sm:$0xff]
    %v1125 = vld [vmem:[%s9 + $0x68] sm:$0xff]
    %v1126 = vld [vmem:[%s9 + $0x70] sm:$0xff]
    %v1127 = vld [vmem:[%s9 + $0x78] sm:$0xff]
    %v1128 = vld [vmem:[%s9 + $0x80] sm:$0xff]
    %v1129 = vld [vmem:[%s9 + $0x88] sm:$0xff]
    %v1130 = vld [vmem:[%s9 + $0x90] sm:$0xff]
    %v1131 = vld [vmem:[%s9 + $0x98] sm:$0xff]
    %v1132 = vld [vmem:[%s9 + $0xa0] sm:$0xff]
    %v1133 = vld [vmem:[%s9 + $0xa8] sm:$0xff]
    %v1134 = vld [vmem:[%s9 + $0xb0] sm:$0xff]
    %v1135 = vld [vmem:[%s9 + $0xb8] sm:$0xff]
    %v1136 = vld [vmem:[%s9 + $0xc0] sm:$0xff]
    %1138 = vset.pattern.permute.xlu0 0
    %1139 = vperm.xlu0 %1138, %v1112
    %v1140 = vpop.permute.xlu0 %1139
    %1143 = vset.pattern.permute.xlu0 0
    %1144 = vperm.xlu0 %1143, %v1113
    %v1145 = vpop.permute.xlu0 %1144
    %1148 = vset.pattern.permute.xlu0 0
    %1149 = vperm.xlu0 %1148, %v1114
    %v1150 = vpop.permute.xlu0 %1149
    %1153 = vset.pattern.permute.xlu0 0
    %1154 = vperm.xlu0 %1153, %v1115
    %v1155 = vpop.permute.xlu0 %1154
    %1158 = vset.pattern.permute.xlu0 0
    %1159 = vperm.xlu0 %1158, %v1116
    %v1160 = vpop.permute.xlu0 %1159
    %1163 = vset.pattern.permute.xlu0 0
    %1164 = vperm.xlu0 %1163, %v1117
    %v1165 = vpop.permute.xlu0 %1164
    %1168 = vset.pattern.permute.xlu0 0
    %1169 = vperm.xlu0 %1168, %v1118
    %v1170 = vpop.permute.xlu0 %1169
    %1173 = vset.pattern.permute.xlu0 0
    %1174 = vperm.xlu0 %1173, %v1119
    %v1175 = vpop.permute.xlu0 %1174
    %1178 = vset.pattern.permute.xlu0 0
    %1179 = vperm.xlu0 %1178, %v1120
    %v1180 = vpop.permute.xlu0 %1179
    %1183 = vset.pattern.permute.xlu0 0
    %1184 = vperm.xlu0 %1183, %v1121
    %v1185 = vpop.permute.xlu0 %1184
    %1188 = vset.pattern.permute.xlu0 0
    %1189 = vperm.xlu0 %1188, %v1122
    %v1190 = vpop.permute.xlu0 %1189
    %1193 = vset.pattern.permute.xlu0 0
    %1194 = vperm.xlu0 %1193, %v1123
    %v1195 = vpop.permute.xlu0 %1194
    %1198 = vset.pattern.permute.xlu0 0
    %1199 = vperm.xlu0 %1198, %v1124
    %v1200 = vpop.permute.xlu0 %1199
    %1203 = vset.pattern.permute.xlu0 0
    %1204 = vperm.xlu0 %1203, %v1125
    %v1205 = vpop.permute.xlu0 %1204
    %1208 = vset.pattern.permute.xlu0 0
    %1209 = vperm.xlu0 %1208, %v1126
    %v1210 = vpop.permute.xlu0 %1209
    %1213 = vset.pattern.permute.xlu0 0
    %1214 = vperm.xlu0 %1213, %v1127
    %v1215 = vpop.permute.xlu0 %1214
    %1218 = vset.pattern.permute.xlu0 0
    %1219 = vperm.xlu0 %1218, %v1128
    %v1220 = vpop.permute.xlu0 %1219
    %1223 = vset.pattern.permute.xlu0 0
    %1224 = vperm.xlu0 %1223, %v1129
    %v1225 = vpop.permute.xlu0 %1224
    %1228 = vset.pattern.permute.xlu0 0
    %1229 = vperm.xlu0 %1228, %v1130
    %v1230 = vpop.permute.xlu0 %1229
    %1233 = vset.pattern.permute.xlu0 0
    %1234 = vperm.xlu0 %1233, %v1131
    %v1235 = vpop.permute.xlu0 %1234
    %1238 = vset.pattern.permute.xlu0 0
    %1239 = vperm.xlu0 %1238, %v1132
    %v1240 = vpop.permute.xlu0 %1239
    %1243 = vset.pattern.permute.xlu0 0
    %1244 = vperm.xlu0 %1243, %v1133
    %v1245 = vpop.permute.xlu0 %1244
    %1248 = vset.pattern.permute.xlu0 0
    %1249 = vperm.xlu0 %1248, %v1134
    %v1250 = vpop.permute.xlu0 %1249
    %1253 = vset.pattern.permute.xlu0 0
    %1254 = vperm.xlu0 %1253, %v1135
    %v1255 = vpop.permute.xlu0 %1254
    %1258 = vset.pattern.permute.xlu0 0
    %1259 = vperm.xlu0 %1258, %v1136
    %v1260 = vpop.permute.xlu0 %1259
    %v1287 = vunpack.c.l.b16 %v1071
    %v1288 = vunpack.c.l.b16 %v1072
    %v1289 = vunpack.c.l.b16 %v1073
    %v1290 = vunpack.c.l.b16 %v1074
    %v1291 = vunpack.c.l.b16 %v1075
    %v1292 = vunpack.c.l.b16 %v1076
    %v1293 = vunpack.c.l.b16 %v1077
    %v1294 = vunpack.c.l.b16 %v1078
    %v1295 = vunpack.c.l.b16 %v1079
    %v1296 = vunpack.c.l.b16 %v1080
    %v1297 = vunpack.c.l.b16 %v1081
    %v1298 = vunpack.c.l.b16 %v1082
    %v1299 = vunpack.c.l.b16 %v1083
    %v1300 = vunpack.c.l.b16 %v1084
    %v1301 = vunpack.c.l.b16 %v1085
    %v1302 = vunpack.c.l.b16 %v1086
    %v1303 = vunpack.c.l.b16 %v1087
    %v1304 = vunpack.c.l.b16 %v1088
    %v1305 = vunpack.c.l.b16 %v1089
    %v1306 = vunpack.c.l.b16 %v1090
    %v1307 = vunpack.c.l.b16 %v1091
    %v1308 = vunpack.c.l.b16 %v1092
    %v1309 = vunpack.c.l.b16 %v1093
    %v1310 = vunpack.c.l.b16 %v1094
    %v1311 = vunpack.c.l.b16 %v1095
    %v1312 = vpack.c.b16 %v1288, %v1287
    %v1313 = vpack.c.b16 %v1290, %v1289
    %v1314 = vpack.c.b16 %v1292, %v1291
    %v1315 = vpack.c.b16 %v1294, %v1293
    %v1316 = vpack.c.b16 %v1296, %v1295
    %v1317 = vpack.c.b16 %v1298, %v1297
    %v1318 = vpack.c.b16 %v1300, %v1299
    %v1319 = vpack.c.b16 %v1302, %v1301
    %v1320 = vpack.c.b16 %v1304, %v1303
    %v1321 = vpack.c.b16 %v1306, %v1305
    %v1322 = vpack.c.b16 %v1308, %v1307
    %v1323 = vpack.c.b16 %v1310, %v1309
    %v1324 = vpack.c.b16 %v1311, %v1311
    %1338 = vmatprep.subr.bf16.mxu0 %v1111
    %1339 = vmatpush1.bf16.msra.mxu0 %v1110
    %1340 = vmatprep.subr.bf16.mxu0 %v1109
    %1341 = vmatpush1.bf16.msra.mxu0 %v1108
    %1342 = vmatprep.subr.bf16.mxu0 %v1107
    %1343 = vmatpush1.bf16.msra.mxu0 %v1106
    %1344 = vmatprep.subr.bf16.mxu0 %v1105
    %1345 = vmatpush1.bf16.msra.mxu0 %v1104
    %1346 = vmatprep.subr.bf16.mxu0 %v1103
    %1347 = vmatpush1.bf16.msra.mxu0 %v1102
    %1348 = vmatprep.subr.bf16.mxu0 %v1101
    %1349 = vmatpush1.bf16.msra.mxu0 %v1100
    %1350 = vmatprep.subr.bf16.mxu0 %v1099
    %1351 = vmatpush1.bf16.msra.mxu0 %v1098
    %1352 = vmatprep.subr.bf16.mxu0 %v1097
    %1353 = vmatpush1.bf16.msra.mxu0 %v1096
    %1354 = vmatprep.subr.bf16.mxu0 0
    %1355 = vmatpush2.bf16.msra.mxu0 0
    %1356 = vmatprep.subr.bf16.mxu0 0
    %1357 = vmatpush2.bf16.msra.mxu0 0
    %1358 = vmatprep.subr.bf16.mxu0 0
    %1359 = vmatpush2.bf16.msra.mxu0 0
    %1360 = vmatprep.subr.bf16.mxu0 0
    %1361 = vmatpush2.bf16.msra.mxu0 0
    %1362 = vmatprep.subr.bf16.mxu0 0
    %1363 = vmatpush2.bf16.msra.mxu0 0
    %1364 = vmatprep.subr.bf16.mxu0 0
    %1365 = vmatpush2.bf16.msra.mxu0 0
    %1366 = vmatprep.subr.bf16.mxu0 0
    %1367 = vmatpush2.bf16.msra.mxu0 0
    %1368 = vmatprep.subr.bf16.mxu0 0
    %1369 = vmatpush2.bf16.msra.mxu0 0
    %1370 = vmatprep.mubr.bf16.mxu0 0
    %1371 = vmatmul.mubr.bf16.gmra.mxu0 %v1312
    %v1372 = vpop.f32.mrf.mxu0
    %v1373 = vadd.f32 %v1140, %v1372
    %v1374 = vpop.f32.mrf.mxu0
    %v1375 = vadd.f32 %v1140, %v1374
    %v1376 = vpop.f32.mrf.mxu0
    %v1377 = vadd.f32 %v1145, %v1376
    %v1378 = vpop.f32.mrf.mxu0
    %v1379 = vadd.f32 %v1145, %v1378
    %1380 = vmatprep.mubr.bf16.mxu0 0
    %1381 = vmatmul.mubr.bf16.gmra.mxu0 %v1313
    %v1382 = vpop.f32.mrf.mxu0
    %v1383 = vadd.f32 %v1150, %v1382
    %v1384 = vpop.f32.mrf.mxu0
    %v1385 = vadd.f32 %v1150, %v1384
    %v1386 = vpop.f32.mrf.mxu0
    %v1387 = vadd.f32 %v1155, %v1386
    %v1388 = vpop.f32.mrf.mxu0
    %v1389 = vadd.f32 %v1155, %v1388
    %1390 = vmatprep.mubr.bf16.mxu0 0
    %1391 = vmatmul.mubr.bf16.gmra.mxu0 %v1314
    %v1392 = vpop.f32.mrf.mxu0
    %v1393 = vadd.f32 %v1160, %v1392
    %v1394 = vpop.f32.mrf.mxu0
    %v1395 = vadd.f32 %v1160, %v1394
    %v1396 = vpop.f32.mrf.mxu0
    %v1397 = vadd.f32 %v1165, %v1396
    %v1398 = vpop.f32.mrf.mxu0
    %v1399 = vadd.f32 %v1165, %v1398
    %1400 = vmatprep.mubr.bf16.mxu0 0
    %1401 = vmatmul.mubr.bf16.gmra.mxu0 %v1315
    %v1402 = vpop.f32.mrf.mxu0
    %v1403 = vadd.f32 %v1170, %v1402
    %v1404 = vpop.f32.mrf.mxu0
    %v1405 = vadd.f32 %v1170, %v1404
    %v1406 = vpop.f32.mrf.mxu0
    %v1407 = vadd.f32 %v1175, %v1406
    %v1408 = vpop.f32.mrf.mxu0
    %v1409 = vadd.f32 %v1175, %v1408
    %1410 = vmatprep.mubr.bf16.mxu0 0
    %1411 = vmatmul.mubr.bf16.gmra.mxu0 %v1316
    %v1412 = vpop.f32.mrf.mxu0
    %v1413 = vadd.f32 %v1180, %v1412
    %v1414 = vpop.f32.mrf.mxu0
    %v1415 = vadd.f32 %v1180, %v1414
    %v1416 = vpop.f32.mrf.mxu0
    %v1417 = vadd.f32 %v1185, %v1416
    %v1418 = vpop.f32.mrf.mxu0
    %v1419 = vadd.f32 %v1185, %v1418
    %1420 = vmatprep.mubr.bf16.mxu0 0
    %1421 = vmatmul.mubr.bf16.gmra.mxu0 %v1317
    %v1422 = vpop.f32.mrf.mxu0
    %v1423 = vadd.f32 %v1190, %v1422
    %v1424 = vpop.f32.mrf.mxu0
    %v1425 = vadd.f32 %v1190, %v1424
    %v1426 = vpop.f32.mrf.mxu0
    %v1427 = vadd.f32 %v1195, %v1426
    %v1428 = vpop.f32.mrf.mxu0
    %v1429 = vadd.f32 %v1195, %v1428
    %1430 = vmatprep.mubr.bf16.mxu0 0
    %1431 = vmatmul.mubr.bf16.gmra.mxu0 %v1318
    %v1432 = vpop.f32.mrf.mxu0
    %v1433 = vadd.f32 %v1200, %v1432
    %v1434 = vpop.f32.mrf.mxu0
    %v1435 = vadd.f32 %v1200, %v1434
    %v1436 = vpop.f32.mrf.mxu0
    %v1437 = vadd.f32 %v1205, %v1436
    %v1438 = vpop.f32.mrf.mxu0
    %v1439 = vadd.f32 %v1205, %v1438
    %1440 = vmatprep.mubr.bf16.mxu0 0
    %1441 = vmatmul.mubr.bf16.gmra.mxu0 %v1319
    %v1442 = vpop.f32.mrf.mxu0
    %v1443 = vadd.f32 %v1210, %v1442
    %v1444 = vpop.f32.mrf.mxu0
    %v1445 = vadd.f32 %v1210, %v1444
    %v1446 = vpop.f32.mrf.mxu0
    %v1447 = vadd.f32 %v1215, %v1446
    %v1448 = vpop.f32.mrf.mxu0
    %v1449 = vadd.f32 %v1215, %v1448
    %1450 = vmatprep.mubr.bf16.mxu0 0
    %1451 = vmatmul.mubr.bf16.gmra.mxu0 %v1320
    %v1452 = vpop.f32.mrf.mxu0
    %v1453 = vadd.f32 %v1220, %v1452
    %v1454 = vpop.f32.mrf.mxu0
    %v1455 = vadd.f32 %v1220, %v1454
    %v1456 = vpop.f32.mrf.mxu0
    %v1457 = vadd.f32 %v1225, %v1456
    %v1458 = vpop.f32.mrf.mxu0
    %v1459 = vadd.f32 %v1225, %v1458
    %1460 = vmatprep.mubr.bf16.mxu0 0
    %1461 = vmatmul.mubr.bf16.gmra.mxu0 %v1321
    %v1462 = vpop.f32.mrf.mxu0
    %v1463 = vadd.f32 %v1230, %v1462
    %v1464 = vpop.f32.mrf.mxu0
    %v1465 = vadd.f32 %v1230, %v1464
    %v1466 = vpop.f32.mrf.mxu0
    %v1467 = vadd.f32 %v1235, %v1466
    %v1468 = vpop.f32.mrf.mxu0
    %v1469 = vadd.f32 %v1235, %v1468
    %1470 = vmatprep.mubr.bf16.mxu0 0
    %1471 = vmatmul.mubr.bf16.gmra.mxu0 %v1322
    %v1472 = vpop.f32.mrf.mxu0
    %v1473 = vadd.f32 %v1240, %v1472
    %v1474 = vpop.f32.mrf.mxu0
    %v1475 = vadd.f32 %v1240, %v1474
    %v1476 = vpop.f32.mrf.mxu0
    %v1477 = vadd.f32 %v1245, %v1476
    %v1478 = vpop.f32.mrf.mxu0
    %v1479 = vadd.f32 %v1245, %v1478
    %1480 = vmatprep.mubr.bf16.mxu0 0
    %1481 = vmatmul.mubr.bf16.gmra.mxu0 %v1323
    %v1482 = vpop.f32.mrf.mxu0
    %v1483 = vadd.f32 %v1250, %v1482
    %v1484 = vpop.f32.mrf.mxu0
    %v1485 = vadd.f32 %v1250, %v1484
    %v1486 = vpop.f32.mrf.mxu0
    %v1487 = vadd.f32 %v1255, %v1486
    %v1488 = vpop.f32.mrf.mxu0
    %v1489 = vadd.f32 %v1255, %v1488
    %1490 = vmatprep.mubr.bf16.mxu0 0
    %1491 = vmatmul.mubr.bf16.gmra.mxu0 %v1324
    %v1492 = vpop.f32.mrf.mxu0
    %v1493 = vadd.f32 %v1260, %v1492
    %v1494 = vpop.f32.mrf.mxu0
    %v1495 = vadd.f32 %v1260, %v1494
    %v1496 = vpop.f32.mrf.mxu0
    %v1497 = vpop.f32.mrf.mxu0
    %1498 = vdwg.mxu0
    %vm1499 = vcmp.gt.f32.partialorder %v1373, 0.0
    %vm1500 = vcmp.gt.f32.partialorder %v1375, 0.0
    %vm1501 = vcmp.gt.f32.partialorder %v1377, 0.0
    %vm1502 = vcmp.gt.f32.partialorder %v1379, 0.0
    %vm1503 = vcmp.gt.f32.partialorder %v1383, 0.0
    %vm1504 = vcmp.gt.f32.partialorder %v1385, 0.0
    %vm1505 = vcmp.gt.f32.partialorder %v1387, 0.0
    %vm1506 = vcmp.gt.f32.partialorder %v1389, 0.0
    %vm1507 = vcmp.gt.f32.partialorder %v1393, 0.0
    %vm1508 = vcmp.gt.f32.partialorder %v1395, 0.0
    %vm1509 = vcmp.gt.f32.partialorder %v1397, 0.0
    %vm1510 = vcmp.gt.f32.partialorder %v1399, 0.0
    %vm1511 = vcmp.gt.f32.partialorder %v1403, 0.0
    %vm1512 = vcmp.gt.f32.partialorder %v1405, 0.0
    %vm1513 = vcmp.gt.f32.partialorder %v1407, 0.0
    %vm1514 = vcmp.gt.f32.partialorder %v1409, 0.0
    %vm1515 = vcmp.gt.f32.partialorder %v1413, 0.0
    %vm1516 = vcmp.gt.f32.partialorder %v1415, 0.0
    %vm1517 = vcmp.gt.f32.partialorder %v1417, 0.0
    %vm1518 = vcmp.gt.f32.partialorder %v1419, 0.0
    %vm1519 = vcmp.gt.f32.partialorder %v1423, 0.0
    %vm1520 = vcmp.gt.f32.partialorder %v1425, 0.0
    %vm1521 = vcmp.gt.f32.partialorder %v1427, 0.0
    %vm1522 = vcmp.gt.f32.partialorder %v1429, 0.0
    %vm1523 = vcmp.gt.f32.partialorder %v1433, 0.0
    %vm1524 = vcmp.gt.f32.partialorder %v1435, 0.0
    %vm1525 = vcmp.gt.f32.partialorder %v1437, 0.0
    %vm1526 = vcmp.gt.f32.partialorder %v1439, 0.0
    %vm1527 = vcmp.gt.f32.partialorder %v1443, 0.0
    %vm1528 = vcmp.gt.f32.partialorder %v1445, 0.0
    %vm1529 = vcmp.gt.f32.partialorder %v1447, 0.0
    %vm1530 = vcmp.gt.f32.partialorder %v1449, 0.0
    %vm1531 = vcmp.gt.f32.partialorder %v1453, 0.0
    %vm1532 = vcmp.gt.f32.partialorder %v1455, 0.0
    %vm1533 = vcmp.gt.f32.partialorder %v1457, 0.0
    %vm1534 = vcmp.gt.f32.partialorder %v1459, 0.0
    %vm1535 = vcmp.gt.f32.partialorder %v1463, 0.0
    %vm1536 = vcmp.gt.f32.partialorder %v1465, 0.0
    %vm1537 = vcmp.gt.f32.partialorder %v1467, 0.0
    %vm1538 = vcmp.gt.f32.partialorder %v1469, 0.0
    %vm1539 = vcmp.gt.f32.partialorder %v1473, 0.0
    %vm1540 = vcmp.gt.f32.partialorder %v1475, 0.0
    %vm1541 = vcmp.gt.f32.partialorder %v1477, 0.0
    %vm1542 = vcmp.gt.f32.partialorder %v1479, 0.0
    %vm1543 = vcmp.gt.f32.partialorder %v1483, 0.0
    %vm1544 = vcmp.gt.f32.partialorder %v1485, 0.0
    %vm1545 = vcmp.gt.f32.partialorder %v1487, 0.0
    %vm1546 = vcmp.gt.f32.partialorder %v1489, 0.0
    %vm1547 = vcmp.gt.f32.partialorder %v1493, 0.0
    %vm1548 = vcmp.gt.f32.partialorder %v1495, 0.0
    %v1549 = vmul.f32 %v1373, 0.01
    %v1550 = vmul.f32 %v1375, 0.01
    %v1551 = vmul.f32 %v1377, 0.01
    %v1552 = vmul.f32 %v1379, 0.01
    %v1553 = vmul.f32 %v1383, 0.01
    %v1554 = vmul.f32 %v1385, 0.01
    %v1555 = vmul.f32 %v1387, 0.01
    %v1556 = vmul.f32 %v1389, 0.01
    %v1557 = vmul.f32 %v1393, 0.01
    %v1558 = vmul.f32 %v1395, 0.01
    %v1559 = vmul.f32 %v1397, 0.01
    %v1560 = vmul.f32 %v1399, 0.01
    %v1561 = vmul.f32 %v1403, 0.01
    %v1562 = vmul.f32 %v1405, 0.01
    %v1563 = vmul.f32 %v1407, 0.01
    %v1564 = vmul.f32 %v1409, 0.01
    %v1565 = vmul.f32 %v1413, 0.01
    %v1566 = vmul.f32 %v1415, 0.01
    %v1567 = vmul.f32 %v1417, 0.01
    %v1568 = vmul.f32 %v1419, 0.01
    %v1569 = vmul.f32 %v1423, 0.01
    %v1570 = vmul.f32 %v1425, 0.01
    %v1571 = vmul.f32 %v1427, 0.01
    %v1572 = vmul.f32 %v1429, 0.01
    %v1573 = vmul.f32 %v1433, 0.01
    %v1574 = vmul.f32 %v1435, 0.01
    %v1575 = vmul.f32 %v1437, 0.01
    %v1576 = vmul.f32 %v1439, 0.01
    %v1577 = vmul.f32 %v1443, 0.01
    %v1578 = vmul.f32 %v1445, 0.01
    %v1579 = vmul.f32 %v1447, 0.01
    %v1580 = vmul.f32 %v1449, 0.01
    %v1581 = vmul.f32 %v1453, 0.01
    %v1582 = vmul.f32 %v1455, 0.01
    %v1583 = vmul.f32 %v1457, 0.01
    %v1584 = vmul.f32 %v1459, 0.01
    %v1585 = vmul.f32 %v1463, 0.01
    %v1586 = vmul.f32 %v1465, 0.01
    %v1587 = vmul.f32 %v1467, 0.01
    %v1588 = vmul.f32 %v1469, 0.01
    %v1589 = vmul.f32 %v1473, 0.01
    %v1590 = vmul.f32 %v1475, 0.01
    %v1591 = vmul.f32 %v1477, 0.01
    %v1592 = vmul.f32 %v1479, 0.01
    %v1593 = vmul.f32 %v1483, 0.01
    %v1594 = vmul.f32 %v1485, 0.01
    %v1595 = vmul.f32 %v1487, 0.01
    %v1596 = vmul.f32 %v1489, 0.01
    %v1597 = vmul.f32 %v1493, 0.01
    %v1598 = vmul.f32 %v1495, 0.01
    %v1599 = vsel %vm1499, %v1373, %v1549
    %v1600 = vsel %vm1500, %v1375, %v1550
    %v1601 = vsel %vm1501, %v1377, %v1551
    %v1602 = vsel %vm1502, %v1379, %v1552
    %v1603 = vsel %vm1503, %v1383, %v1553
    %v1604 = vsel %vm1504, %v1385, %v1554
    %v1605 = vsel %vm1505, %v1387, %v1555
    %v1606 = vsel %vm1506, %v1389, %v1556
    %v1607 = vsel %vm1507, %v1393, %v1557
    %v1608 = vsel %vm1508, %v1395, %v1558
    %v1609 = vsel %vm1509, %v1397, %v1559
    %v1610 = vsel %vm1510, %v1399, %v1560
    %v1611 = vsel %vm1511, %v1403, %v1561
    %v1612 = vsel %vm1512, %v1405, %v1562
    %v1613 = vsel %vm1513, %v1407, %v1563
    %v1614 = vsel %vm1514, %v1409, %v1564
    %v1615 = vsel %vm1515, %v1413, %v1565
    %v1616 = vsel %vm1516, %v1415, %v1566
    %v1617 = vsel %vm1517, %v1417, %v1567
    %v1618 = vsel %vm1518, %v1419, %v1568
    %v1619 = vsel %vm1519, %v1423, %v1569
    %v1620 = vsel %vm1520, %v1425, %v1570
    %v1621 = vsel %vm1521, %v1427, %v1571
    %v1622 = vsel %vm1522, %v1429, %v1572
    %v1623 = vsel %vm1523, %v1433, %v1573
    %v1624 = vsel %vm1524, %v1435, %v1574
    %v1625 = vsel %vm1525, %v1437, %v1575
    %v1626 = vsel %vm1526, %v1439, %v1576
    %v1627 = vsel %vm1527, %v1443, %v1577
    %v1628 = vsel %vm1528, %v1445, %v1578
    %v1629 = vsel %vm1529, %v1447, %v1579
    %v1630 = vsel %vm1530, %v1449, %v1580
    %v1631 = vsel %vm1531, %v1453, %v1581
    %v1632 = vsel %vm1532, %v1455, %v1582
    %v1633 = vsel %vm1533, %v1457, %v1583
    %v1634 = vsel %vm1534, %v1459, %v1584
    %v1635 = vsel %vm1535, %v1463, %v1585
    %v1636 = vsel %vm1536, %v1465, %v1586
    %v1637 = vsel %vm1537, %v1467, %v1587
    %v1638 = vsel %vm1538, %v1469, %v1588
    %v1639 = vsel %vm1539, %v1473, %v1589
    %v1640 = vsel %vm1540, %v1475, %v1590
    %v1641 = vsel %vm1541, %v1477, %v1591
    %v1642 = vsel %vm1542, %v1479, %v1592
    %v1643 = vsel %vm1543, %v1483, %v1593
    %v1644 = vsel %vm1544, %v1485, %v1594
    %v1645 = vsel %vm1545, %v1487, %v1595
    %v1646 = vsel %vm1546, %v1489, %v1596
    %v1647 = vsel %vm1547, %v1493, %v1597
    %v1648 = vsel %vm1548, %v1495, %v1598
    %v1649 = vld [vmem:[%s10] sm:$0xff]
    %v1650 = vld [vmem:[%s10 + $0x8] sm:$0xff]
    %v1651 = vld [vmem:[%s10 + $0x10] sm:$0xff]
    %v1652 = vld [vmem:[%s10 + $0x18] sm:$0xff]
    %v1653 = vld [vmem:[%s10 + $0x20] sm:$0xff]
    %v1654 = vld [vmem:[%s10 + $0x28] sm:$0xff]
    %v1655 = vld [vmem:[%s10 + $0x30] sm:$0xff]
    %v1656 = vld [vmem:[%s10 + $0x38] sm:$0xff]
    %v1657 = vld [vmem:[%s10 + $0x40] sm:$0xff]
    %v1658 = vld [vmem:[%s10 + $0x48] sm:$0xff]
    %v1659 = vld [vmem:[%s10 + $0x50] sm:$0xff]
    %v1660 = vld [vmem:[%s10 + $0x58] sm:$0xff]
    %v1661 = vld [vmem:[%s10 + $0x60] sm:$0x33]
    %v1662 = vpack.c.bf16 %v1601, %v1599
    %v1663 = vpack.c.bf16 %v1602, %v1600
    %v1664 = vpack.c.bf16 %v1605, %v1603
    %v1665 = vpack.c.bf16 %v1606, %v1604
    %v1666 = vpack.c.bf16 %v1609, %v1607
    %v1667 = vpack.c.bf16 %v1610, %v1608
    %v1668 = vpack.c.bf16 %v1613, %v1611
    %v1669 = vpack.c.bf16 %v1614, %v1612
    %v1670 = vpack.c.bf16 %v1617, %v1615
    %v1671 = vpack.c.bf16 %v1618, %v1616
    %v1672 = vpack.c.bf16 %v1621, %v1619
    %v1673 = vpack.c.bf16 %v1622, %v1620
    %v1674 = vpack.c.bf16 %v1625, %v1623
    %v1675 = vpack.c.bf16 %v1626, %v1624
    %v1676 = vpack.c.bf16 %v1629, %v1627
    %v1677 = vpack.c.bf16 %v1630, %v1628
    %v1678 = vpack.c.bf16 %v1633, %v1631
    %v1679 = vpack.c.bf16 %v1634, %v1632
    %v1680 = vpack.c.bf16 %v1637, %v1635
    %v1681 = vpack.c.bf16 %v1638, %v1636
    %v1682 = vpack.c.bf16 %v1641, %v1639
    %v1683 = vpack.c.bf16 %v1642, %v1640
    %v1684 = vpack.c.bf16 %v1645, %v1643
    %v1685 = vpack.c.bf16 %v1646, %v1644
    %v1686 = vpack.c.bf16 %v1647, %v1647
    %v1687 = vpack.c.bf16 %v1648, %v1648
    %v1688 = vld [vmem:[%s11] sm:$0xff]
    %v1689 = vld [vmem:[%s11 + $0x8] sm:$0xff]
    %v1690 = vld [vmem:[%s11 + $0x10] sm:$0xff]
    %v1691 = vld [vmem:[%s11 + $0x18] sm:$0xff]
    %v1692 = vld [vmem:[%s11 + $0x20] sm:$0xff]
    %v1693 = vld [vmem:[%s11 + $0x28] sm:$0xff]
    %v1694 = vld [vmem:[%s11 + $0x30] sm:$0xff]
    %v1695 = vld [vmem:[%s11 + $0x38] sm:$0xff]
    %v1696 = vld [vmem:[%s11 + $0x40] sm:$0xff]
    %v1697 = vld [vmem:[%s11 + $0x48] sm:$0xff]
    %v1698 = vld [vmem:[%s11 + $0x50] sm:$0xff]
    %v1699 = vld [vmem:[%s11 + $0x58] sm:$0xff]
    %v1700 = vld [vmem:[%s11 + $0x60] sm:$0xf]
    %1702 = vset.pattern.permute.xlu0 0
    %1703 = vperm.xlu0 %1702, %v1688
    %v1704 = vpop.permute.xlu0 %1703
    %1707 = vset.pattern.permute.xlu0 0
    %1708 = vperm.xlu0 %1707, %v1689
    %v1709 = vpop.permute.xlu0 %1708
    %1712 = vset.pattern.permute.xlu0 0
    %1713 = vperm.xlu0 %1712, %v1690
    %v1714 = vpop.permute.xlu0 %1713
    %1717 = vset.pattern.permute.xlu0 0
    %1718 = vperm.xlu0 %1717, %v1691
    %v1719 = vpop.permute.xlu0 %1718
    %1722 = vset.pattern.permute.xlu0 0
    %1723 = vperm.xlu0 %1722, %v1692
    %v1724 = vpop.permute.xlu0 %1723
    %1727 = vset.pattern.permute.xlu0 0
    %1728 = vperm.xlu0 %1727, %v1693
    %v1729 = vpop.permute.xlu0 %1728
    %1732 = vset.pattern.permute.xlu0 0
    %1733 = vperm.xlu0 %1732, %v1694
    %v1734 = vpop.permute.xlu0 %1733
    %1737 = vset.pattern.permute.xlu0 0
    %1738 = vperm.xlu0 %1737, %v1695
    %v1739 = vpop.permute.xlu0 %1738
    %1742 = vset.pattern.permute.xlu0 0
    %1743 = vperm.xlu0 %1742, %v1696
    %v1744 = vpop.permute.xlu0 %1743
    %1747 = vset.pattern.permute.xlu0 0
    %1748 = vperm.xlu0 %1747, %v1697
    %v1749 = vpop.permute.xlu0 %1748
    %1752 = vset.pattern.permute.xlu0 0
    %1753 = vperm.xlu0 %1752, %v1698
    %v1754 = vpop.permute.xlu0 %1753
    %1757 = vset.pattern.permute.xlu0 0
    %1758 = vperm.xlu0 %1757, %v1699
    %v1759 = vpop.permute.xlu0 %1758
    %1762 = vset.pattern.permute.xlu0 0
    %1763 = vperm.xlu0 %1762, %v1700
    %v1764 = vpop.permute.xlu0 %1763
    %v1779 = vunpack.c.l.b16 %v1649
    %v1780 = vunpack.c.h.b16 %v1649
    %v1781 = vunpack.c.l.b16 %v1650
    %v1782 = vunpack.c.h.b16 %v1650
    %v1783 = vunpack.c.l.b16 %v1651
    %v1784 = vunpack.c.h.b16 %v1651
    %v1785 = vunpack.c.l.b16 %v1652
    %v1786 = vunpack.c.h.b16 %v1652
    %v1787 = vunpack.c.l.b16 %v1653
    %v1788 = vunpack.c.h.b16 %v1653
    %v1789 = vunpack.c.l.b16 %v1654
    %v1790 = vunpack.c.h.b16 %v1654
    %v1791 = vunpack.c.l.b16 %v1655
    %v1792 = vunpack.c.h.b16 %v1655
    %v1793 = vunpack.c.l.b16 %v1656
    %v1794 = vunpack.c.h.b16 %v1656
    %v1795 = vunpack.c.l.b16 %v1657
    %v1796 = vunpack.c.h.b16 %v1657
    %v1797 = vunpack.c.l.b16 %v1658
    %v1798 = vunpack.c.h.b16 %v1658
    %v1799 = vunpack.c.l.b16 %v1659
    %v1800 = vunpack.c.h.b16 %v1659
    %v1801 = vunpack.c.l.b16 %v1660
    %v1802 = vunpack.c.h.b16 %v1660
    %v1803 = vunpack.c.l.b16 %v1661
    %v1804 = vunpack.c.h.b16 %v1661
    %v1805 = vpack.c.b16 %v1781, %v1779
    %v1806 = vpack.c.b16 %v1782, %v1780
    %v1807 = vpack.c.b16 %v1785, %v1783
    %v1808 = vpack.c.b16 %v1786, %v1784
    %v1809 = vpack.c.b16 %v1789, %v1787
    %v1810 = vpack.c.b16 %v1790, %v1788
    %v1811 = vpack.c.b16 %v1793, %v1791
    %v1812 = vpack.c.b16 %v1794, %v1792
    %v1813 = vpack.c.b16 %v1797, %v1795
    %v1814 = vpack.c.b16 %v1798, %v1796
    %v1815 = vpack.c.b16 %v1801, %v1799
    %v1816 = vpack.c.b16 %v1802, %v1800
    %v1817 = vpack.c.b16 %v1803, %v1803
    %v1818 = vpack.c.b16 %v1804, %v1804
    %vm1826 = vcmask 588800
    %v1828 = vsel %vm1826, %v1806, 0
    %v1831 = vsel %vm1826, %v1808, 0
    %v1834 = vsel %vm1826, %v1810, 0
    %v1837 = vsel %vm1826, %v1812, 0
    %v1840 = vsel %vm1826, %v1814, 0
    %v1843 = vsel %vm1826, %v1816, 0
    %v1846 = vsel %vm1826, %v1818, 0
    %vm1848 = vcmask 1043456
    %v1850 = vsel %vm1848, %v1686, 0
    %v1853 = vsel %vm1848, %v1687, 0
    %1855 = vmatprep.subr.bf16.mxu0 %v1677
    %1856 = vmatpush1.bf16.msra.mxu0 %v1676
    %1857 = vmatprep.subr.bf16.mxu0 %v1675
    %1858 = vmatpush1.bf16.msra.mxu0 %v1674
    %1859 = vmatprep.subr.bf16.mxu0 %v1673
    %1860 = vmatpush1.bf16.msra.mxu0 %v1672
    %1861 = vmatprep.subr.bf16.mxu0 %v1671
    %1862 = vmatpush1.bf16.msra.mxu0 %v1670
    %1863 = vmatprep.subr.bf16.mxu0 %v1669
    %1864 = vmatpush1.bf16.msra.mxu0 %v1668
    %1865 = vmatprep.subr.bf16.mxu0 %v1667
    %1866 = vmatpush1.bf16.msra.mxu0 %v1666
    %1867 = vmatprep.subr.bf16.mxu0 %v1665
    %1868 = vmatpush1.bf16.msra.mxu0 %v1664
    %1869 = vmatprep.subr.bf16.mxu0 %v1663
    %1870 = vmatpush1.bf16.msra.mxu0 %v1662
    %1871 = vmatprep.subr.bf16.mxu0 0
    %1872 = vmatpush2.bf16.msra.mxu0 0
    %1873 = vmatprep.subr.bf16.mxu0 0
    %1874 = vmatpush2.bf16.msra.mxu0 0
    %1875 = vmatprep.subr.bf16.mxu0 0
    %1876 = vmatpush2.bf16.msra.mxu0 0
    %1877 = vmatprep.subr.bf16.mxu0 %v1853
    %1878 = vmatpush2.bf16.msra.mxu0 %v1850
    %1879 = vmatprep.subr.bf16.mxu0 %v1685
    %1880 = vmatpush2.bf16.msra.mxu0 %v1684
    %1881 = vmatprep.subr.bf16.mxu0 %v1683
    %1882 = vmatpush2.bf16.msra.mxu0 %v1682
    %1883 = vmatprep.subr.bf16.mxu0 %v1681
    %1884 = vmatpush2.bf16.msra.mxu0 %v1680
    %1885 = vmatprep.subr.bf16.mxu0 %v1679
    %1886 = vmatpush2.bf16.msra.mxu0 %v1678
    %1887 = vmatprep.mubr.bf16.mxu0 %v1828
    %1888 = vmatmul.mubr.bf16.gmra.mxu0 %v1805
    %v1889 = vpop.f32.mrf.mxu0
    %v1890 = vadd.f32 %v1704, %v1889
    %v1891 = vpop.f32.mrf.mxu0
    %v1892 = vadd.f32 %v1704, %v1891
    %v1893 = vpop.f32.mrf.mxu0
    %v1894 = vadd.f32 %v1709, %v1893
    %v1895 = vpop.f32.mrf.mxu0
    %v1896 = vadd.f32 %v1709, %v1895
    %1897 = vmatprep.mubr.bf16.mxu0 %v1831
    %1898 = vmatmul.mubr.bf16.gmra.mxu0 %v1807
    %v1899 = vpop.f32.mrf.mxu0
    %v1900 = vadd.f32 %v1714, %v1899
    %v1901 = vpop.f32.mrf.mxu0
    %v1902 = vadd.f32 %v1714, %v1901
    %v1903 = vpop.f32.mrf.mxu0
    %v1904 = vadd.f32 %v1719, %v1903
    %v1905 = vpop.f32.mrf.mxu0
    %v1906 = vadd.f32 %v1719, %v1905
    %1907 = vmatprep.mubr.bf16.mxu0 %v1834
    %1908 = vmatmul.mubr.bf16.gmra.mxu0 %v1809
    %v1909 = vpop.f32.mrf.mxu0
    %v1910 = vadd.f32 %v1724, %v1909
    %v1911 = vpop.f32.mrf.mxu0
    %v1912 = vadd.f32 %v1724, %v1911
    %v1913 = vpop.f32.mrf.mxu0
    %v1914 = vadd.f32 %v1729, %v1913
    %v1915 = vpop.f32.mrf.mxu0
    %v1916 = vadd.f32 %v1729, %v1915
    %1917 = vmatprep.mubr.bf16.mxu0 %v1837
    %1918 = vmatmul.mubr.bf16.gmra.mxu0 %v1811
    %v1919 = vpop.f32.mrf.mxu0
    %v1920 = vadd.f32 %v1734, %v1919
    %v1921 = vpop.f32.mrf.mxu0
    %v1922 = vadd.f32 %v1734, %v1921
    %v1923 = vpop.f32.mrf.mxu0
    %v1924 = vadd.f32 %v1739, %v1923
    %v1925 = vpop.f32.mrf.mxu0
    %v1926 = vadd.f32 %v1739, %v1925
    %1927 = vmatprep.mubr.bf16.mxu0 %v1840
    %1928 = vmatmul.mubr.bf16.gmra.mxu0 %v1813
    %v1929 = vpop.f32.mrf.mxu0
    %v1930 = vadd.f32 %v1744, %v1929
    %v1931 = vpop.f32.mrf.mxu0
    %v1932 = vadd.f32 %v1744, %v1931
    %v1933 = vpop.f32.mrf.mxu0
    %v1934 = vadd.f32 %v1749, %v1933
    %v1935 = vpop.f32.mrf.mxu0
    %v1936 = vadd.f32 %v1749, %v1935
    %1937 = vmatprep.mubr.bf16.mxu0 %v1843
    %1938 = vmatmul.mubr.bf16.gmra.mxu0 %v1815
    %v1939 = vpop.f32.mrf.mxu0
    %v1940 = vadd.f32 %v1754, %v1939
    %v1941 = vpop.f32.mrf.mxu0
    %v1942 = vadd.f32 %v1754, %v1941
    %v1943 = vpop.f32.mrf.mxu0
    %v1944 = vadd.f32 %v1759, %v1943
    %v1945 = vpop.f32.mrf.mxu0
    %v1946 = vadd.f32 %v1759, %v1945
    %1947 = vmatprep.mubr.bf16.mxu0 %v1846
    %1948 = vmatmul.mubr.bf16.gmra.mxu0 %v1817
    %v1949 = vpop.f32.mrf.mxu0
    %v1950 = vadd.f32 %v1764, %v1949
    %v1951 = vpop.f32.mrf.mxu0
    %v1952 = vadd.f32 %v1764, %v1951
    %v1953 = vpop.f32.mrf.mxu0
    %v1954 = vpop.f32.mrf.mxu0
    %1955 = vdwg.mxu0
    %vm1956 = vcmp.gt.f32.partialorder %v1890, 0.0
    %vm1957 = vcmp.gt.f32.partialorder %v1892, 0.0
    %vm1958 = vcmp.gt.f32.partialorder %v1894, 0.0
    %vm1959 = vcmp.gt.f32.partialorder %v1896, 0.0
    %vm1960 = vcmp.gt.f32.partialorder %v1900, 0.0
    %vm1961 = vcmp.gt.f32.partialorder %v1902, 0.0
    %vm1962 = vcmp.gt.f32.partialorder %v1904, 0.0
    %vm1963 = vcmp.gt.f32.partialorder %v1906, 0.0
    %vm1964 = vcmp.gt.f32.partialorder %v1910, 0.0
    %vm1965 = vcmp.gt.f32.partialorder %v1912, 0.0
    %vm1966 = vcmp.gt.f32.partialorder %v1914, 0.0
    %vm1967 = vcmp.gt.f32.partialorder %v1916, 0.0
    %vm1968 = vcmp.gt.f32.partialorder %v1920, 0.0
    %vm1969 = vcmp.gt.f32.partialorder %v1922, 0.0
    %vm1970 = vcmp.gt.f32.partialorder %v1924, 0.0
    %vm1971 = vcmp.gt.f32.partialorder %v1926, 0.0
    %vm1972 = vcmp.gt.f32.partialorder %v1930, 0.0
    %vm1973 = vcmp.gt.f32.partialorder %v1932, 0.0
    %vm1974 = vcmp.gt.f32.partialorder %v1934, 0.0
    %vm1975 = vcmp.gt.f32.partialorder %v1936, 0.0
    %vm1976 = vcmp.gt.f32.partialorder %v1940, 0.0
    %vm1977 = vcmp.gt.f32.partialorder %v1942, 0.0
    %vm1978 = vcmp.gt.f32.partialorder %v1944, 0.0
    %vm1979 = vcmp.gt.f32.partialorder %v1946, 0.0
    %vm1980 = vcmp.gt.f32.partialorder %v1950, 0.0
    %vm1981 = vcmp.gt.f32.partialorder %v1952, 0.0
    %v1982 = vmul.f32 %v1890, 0.01
    %v1983 = vmul.f32 %v1892, 0.01
    %v1984 = vmul.f32 %v1894, 0.01
    %v1985 = vmul.f32 %v1896, 0.01
    %v1986 = vmul.f32 %v1900, 0.01
    %v1987 = vmul.f32 %v1902, 0.01
    %v1988 = vmul.f32 %v1904, 0.01
    %v1989 = vmul.f32 %v1906, 0.01
    %v1990 = vmul.f32 %v1910, 0.01
    %v1991 = vmul.f32 %v1912, 0.01
    %v1992 = vmul.f32 %v1914, 0.01
    %v1993 = vmul.f32 %v1916, 0.01
    %v1994 = vmul.f32 %v1920, 0.01
    %v1995 = vmul.f32 %v1922, 0.01
    %v1996 = vmul.f32 %v1924, 0.01
    %v1997 = vmul.f32 %v1926, 0.01
    %v1998 = vmul.f32 %v1930, 0.01
    %v1999 = vmul.f32 %v1932, 0.01
    %v2000 = vmul.f32 %v1934, 0.01
    %v2001 = vmul.f32 %v1936, 0.01
    %v2002 = vmul.f32 %v1940, 0.01
    %v2003 = vmul.f32 %v1942, 0.01
    %v2004 = vmul.f32 %v1944, 0.01
    %v2005 = vmul.f32 %v1946, 0.01
    %v2006 = vmul.f32 %v1950, 0.01
    %v2007 = vmul.f32 %v1952, 0.01
    %v2008 = vsel %vm1956, %v1890, %v1982
    %v2009 = vsel %vm1957, %v1892, %v1983
    %v2010 = vsel %vm1958, %v1894, %v1984
    %v2011 = vsel %vm1959, %v1896, %v1985
    %v2012 = vsel %vm1960, %v1900, %v1986
    %v2013 = vsel %vm1961, %v1902, %v1987
    %v2014 = vsel %vm1962, %v1904, %v1988
    %v2015 = vsel %vm1963, %v1906, %v1989
    %v2016 = vsel %vm1964, %v1910, %v1990
    %v2017 = vsel %vm1965, %v1912, %v1991
    %v2018 = vsel %vm1966, %v1914, %v1992
    %v2019 = vsel %vm1967, %v1916, %v1993
    %v2020 = vsel %vm1968, %v1920, %v1994
    %v2021 = vsel %vm1969, %v1922, %v1995
    %v2022 = vsel %vm1970, %v1924, %v1996
    %v2023 = vsel %vm1971, %v1926, %v1997
    %v2024 = vsel %vm1972, %v1930, %v1998
    %v2025 = vsel %vm1973, %v1932, %v1999
    %v2026 = vsel %vm1974, %v1934, %v2000
    %v2027 = vsel %vm1975, %v1936, %v2001
    %v2028 = vsel %vm1976, %v1940, %v2002
    %v2029 = vsel %vm1977, %v1942, %v2003
    %v2030 = vsel %vm1978, %v1944, %v2004
    %v2031 = vsel %vm1979, %v1946, %v2005
    %v2032 = vsel %vm1980, %v1950, %v2006
    %v2033 = vsel %vm1981, %v1952, %v2007
    %v2034 = vld [vmem:[%s12] sm:$0xf]
    %v2035 = vld [vmem:[%s12 + $0x4] sm:$0xf]
    %v2036 = vld [vmem:[%s12 + $0x8] sm:$0xf]
    %v2037 = vld [vmem:[%s12 + $0xc] sm:$0xf]
    %v2038 = vld [vmem:[%s12 + $0x10] sm:$0xf]
    %v2039 = vld [vmem:[%s12 + $0x14] sm:$0xf]
    %v2040 = vld [vmem:[%s12 + $0x18] sm:$0x1]
    %v2041 = vpack.c.bf16 %v2010, %v2008
    %v2042 = vpack.c.bf16 %v2011, %v2009
    %v2043 = vpack.c.bf16 %v2014, %v2012
    %v2044 = vpack.c.bf16 %v2015, %v2013
    %v2045 = vpack.c.bf16 %v2018, %v2016
    %v2046 = vpack.c.bf16 %v2019, %v2017
    %v2047 = vpack.c.bf16 %v2022, %v2020
    %v2048 = vpack.c.bf16 %v2023, %v2021
    %v2049 = vpack.c.bf16 %v2026, %v2024
    %v2050 = vpack.c.bf16 %v2027, %v2025
    %v2051 = vpack.c.bf16 %v2030, %v2028
    %v2052 = vpack.c.bf16 %v2031, %v2029
    %v2053 = vpack.c.bf16 %v2032, %v2032
    %v2054 = vpack.c.bf16 %v2033, %v2033
    %v2055 = vld [vmem:[%s13] sm:$0xff]
    %v2056 = vld [vmem:[%s13 + $0x8] sm:$0xff]
    %v2057 = vld [vmem:[%s13 + $0x10] sm:$0xff]
    %v2058 = vld [vmem:[%s13 + $0x18] sm:$0xff]
    %v2059 = vld [vmem:[%s13 + $0x20] sm:$0xff]
    %v2060 = vld [vmem:[%s13 + $0x28] sm:$0xff]
    %v2061 = vld [vmem:[%s13 + $0x30] sm:$0x3]
    %2063 = vset.pattern.permute.xlu0 0
    %2064 = vperm.xlu0 %2063, %v2055
    %v2065 = vpop.permute.xlu0 %2064
    %2068 = vset.pattern.permute.xlu0 0
    %2069 = vperm.xlu0 %2068, %v2056
    %v2070 = vpop.permute.xlu0 %2069
    %2073 = vset.pattern.permute.xlu0 0
    %2074 = vperm.xlu0 %2073, %v2057
    %v2075 = vpop.permute.xlu0 %2074
    %2078 = vset.pattern.permute.xlu0 0
    %2079 = vperm.xlu0 %2078, %v2058
    %v2080 = vpop.permute.xlu0 %2079
    %2083 = vset.pattern.permute.xlu0 0
    %2084 = vperm.xlu0 %2083, %v2059
    %v2085 = vpop.permute.xlu0 %2084
    %2088 = vset.pattern.permute.xlu0 0
    %2089 = vperm.xlu0 %2088, %v2060
    %v2090 = vpop.permute.xlu0 %2089
    %2093 = vset.pattern.permute.xlu0 0
    %2094 = vperm.xlu0 %2093, %v2061
    %v2095 = vpop.permute.xlu0 %2094
    %v2104 = vunpack.c.l.b16 %v2034
    %v2105 = vunpack.c.l.b16 %v2035
    %v2106 = vunpack.c.l.b16 %v2036
    %v2107 = vunpack.c.l.b16 %v2037
    %v2108 = vunpack.c.l.b16 %v2038
    %v2109 = vunpack.c.l.b16 %v2039
    %v2110 = vunpack.c.l.b16 %v2040
    %v2111 = vpack.c.b16 %v2105, %v2104
    %v2112 = vpack.c.b16 %v2107, %v2106
    %v2113 = vpack.c.b16 %v2109, %v2108
    %v2114 = vpack.c.b16 %v2110, %v2110
    %vm2115 = vcmask 818176
    %v2117 = vsel %vm2115, %v2111, 0
    %v2120 = vsel %vm2115, %v2112, 0
    %v2123 = vsel %vm2115, %v2113, 0
    %v2126 = vsel %vm2115, %v2114, 0
    %vm2128 = vcmask 1041408
    %v2130 = vsel %vm2128, %v2053, 0
    %v2133 = vsel %vm2128, %v2054, 0
    %2135 = vmatprep.subr.bf16.mxu0 0
    %2136 = vmatpush1.bf16.msra.mxu0 0
    %2137 = vmatprep.subr.bf16.mxu0 %v2133
    %2138 = vmatpush1.bf16.msra.mxu0 %v2130
    %2139 = vmatprep.subr.bf16.mxu0 %v2052
    %2140 = vmatpush1.bf16.msra.mxu0 %v2051
    %2141 = vmatprep.subr.bf16.mxu0 %v2050
    %2142 = vmatpush1.bf16.msra.mxu0 %v2049
    %2143 = vmatprep.subr.bf16.mxu0 %v2048
    %2144 = vmatpush1.bf16.msra.mxu0 %v2047
    %2145 = vmatprep.subr.bf16.mxu0 %v2046
    %2146 = vmatpush1.bf16.msra.mxu0 %v2045
    %2147 = vmatprep.subr.bf16.mxu0 %v2044
    %2148 = vmatpush1.bf16.msra.mxu0 %v2043
    %2149 = vmatprep.subr.bf16.mxu0 %v2042
    %2150 = vmatpush1.bf16.msra.mxu0 %v2041
    %2151 = vmatprep.subr.bf16.mxu0 0
    %2152 = vmatpush2.bf16.msra.mxu0 0
    %2153 = vmatprep.subr.bf16.mxu0 0
    %2154 = vmatpush2.bf16.msra.mxu0 0
    %2155 = vmatprep.subr.bf16.mxu0 0
    %2156 = vmatpush2.bf16.msra.mxu0 0
    %2157 = vmatprep.subr.bf16.mxu0 0
    %2158 = vmatpush2.bf16.msra.mxu0 0
    %2159 = vmatprep.subr.bf16.mxu0 0
    %2160 = vmatpush2.bf16.msra.mxu0 0
    %2161 = vmatprep.subr.bf16.mxu0 0
    %2162 = vmatpush2.bf16.msra.mxu0 0
    %2163 = vmatprep.subr.bf16.mxu0 0
    %2164 = vmatpush2.bf16.msra.mxu0 0
    %2165 = vmatprep.subr.bf16.mxu0 0
    %2166 = vmatpush2.bf16.msra.mxu0 0
    %2167 = vmatprep.mubr.bf16.mxu0 0
    %2168 = vmatmul.mubr.bf16.gmra.mxu0 %v2117
    %v2169 = vpop.f32.mrf.mxu0
    %v2170 = vadd.f32 %v2065, %v2169
    %v2171 = vpop.f32.mrf.mxu0
    %v2172 = vadd.f32 %v2065, %v2171
    %v2173 = vpop.f32.mrf.mxu0
    %v2174 = vadd.f32 %v2070, %v2173
    %v2175 = vpop.f32.mrf.mxu0
    %v2176 = vadd.f32 %v2070, %v2175
    %2177 = vmatprep.mubr.bf16.mxu0 0
    %2178 = vmatmul.mubr.bf16.gmra.mxu0 %v2120
    %v2179 = vpop.f32.mrf.mxu0
    %v2180 = vadd.f32 %v2075, %v2179
    %v2181 = vpop.f32.mrf.mxu0
    %v2182 = vadd.f32 %v2075, %v2181
    %v2183 = vpop.f32.mrf.mxu0
    %v2184 = vadd.f32 %v2080, %v2183
    %v2185 = vpop.f32.mrf.mxu0
    %v2186 = vadd.f32 %v2080, %v2185
    %2187 = vmatprep.mubr.bf16.mxu0 0
    %2188 = vmatmul.mubr.bf16.gmra.mxu0 %v2123
    %v2189 = vpop.f32.mrf.mxu0
    %v2190 = vadd.f32 %v2085, %v2189
    %v2191 = vpop.f32.mrf.mxu0
    %v2192 = vadd.f32 %v2085, %v2191
    %v2193 = vpop.f32.mrf.mxu0
    %v2194 = vadd.f32 %v2090, %v2193
    %v2195 = vpop.f32.mrf.mxu0
    %v2196 = vadd.f32 %v2090, %v2195
    %2197 = vmatprep.mubr.bf16.mxu0 0
    %2198 = vmatmul.mubr.bf16.gmra.mxu0 %v2126
    %v2199 = vpop.f32.mrf.mxu0
    %v2200 = vadd.f32 %v2095, %v2199
    %v2201 = vpop.f32.mrf.mxu0
    %v2202 = vadd.f32 %v2095, %v2201
    %v2203 = vpop.f32.mrf.mxu0
    %v2204 = vpop.f32.mrf.mxu0
    %2205 = vdwg.mxu0
    %vm2206 = vcmp.gt.f32.partialorder %v2170, 0.0
    %vm2207 = vcmp.gt.f32.partialorder %v2172, 0.0
    %vm2208 = vcmp.gt.f32.partialorder %v2174, 0.0
    %vm2209 = vcmp.gt.f32.partialorder %v2176, 0.0
    %vm2210 = vcmp.gt.f32.partialorder %v2180, 0.0
    %vm2211 = vcmp.gt.f32.partialorder %v2182, 0.0
    %vm2212 = vcmp.gt.f32.partialorder %v2184, 0.0
    %vm2213 = vcmp.gt.f32.partialorder %v2186, 0.0
    %vm2214 = vcmp.gt.f32.partialorder %v2190, 0.0
    %vm2215 = vcmp.gt.f32.partialorder %v2192, 0.0
    %vm2216 = vcmp.gt.f32.partialorder %v2194, 0.0
    %vm2217 = vcmp.gt.f32.partialorder %v2196, 0.0
    %vm2218 = vcmp.gt.f32.partialorder %v2200, 0.0
    %vm2219 = vcmp.gt.f32.partialorder %v2202, 0.0
    %v2220 = vmul.f32 %v2170, 0.01
    %v2221 = vmul.f32 %v2172, 0.01
    %v2222 = vmul.f32 %v2174, 0.01
    %v2223 = vmul.f32 %v2176, 0.01
    %v2224 = vmul.f32 %v2180, 0.01
    %v2225 = vmul.f32 %v2182, 0.01
    %v2226 = vmul.f32 %v2184, 0.01
    %v2227 = vmul.f32 %v2186, 0.01
    %v2228 = vmul.f32 %v2190, 0.01
    %v2229 = vmul.f32 %v2192, 0.01
    %v2230 = vmul.f32 %v2194, 0.01
    %v2231 = vmul.f32 %v2196, 0.01
    %v2232 = vmul.f32 %v2200, 0.01
    %v2233 = vmul.f32 %v2202, 0.01
    %v2234 = vsel %vm2206, %v2170, %v2220
    %v2235 = vsel %vm2207, %v2172, %v2221
    %v2236 = vsel %vm2208, %v2174, %v2222
    %v2237 = vsel %vm2209, %v2176, %v2223
    %v2238 = vsel %vm2210, %v2180, %v2224
    %v2239 = vsel %vm2211, %v2182, %v2225
    %v2240 = vsel %vm2212, %v2184, %v2226
    %v2241 = vsel %vm2213, %v2186, %v2227
    %v2242 = vsel %vm2214, %v2190, %v2228
    %v2243 = vsel %vm2215, %v2192, %v2229
    %v2244 = vsel %vm2216, %v2194, %v2230
    %v2245 = vsel %vm2217, %v2196, %v2231
    %v2246 = vsel %vm2218, %v2200, %v2232
    %v2247 = vsel %vm2219, %v2202, %v2233
    %v2248 = vld [vmem:[%s14] sm:$0xff]
    %v2249 = vld [vmem:[%s14 + $0x8] sm:$0xff]
    %v2250 = vld [vmem:[%s14 + $0x10] sm:$0xff]
    %v2251 = vld [vmem:[%s14 + $0x18] sm:$0xff]
    %v2252 = vld [vmem:[%s14 + $0x20] sm:$0xff]
    %v2253 = vld [vmem:[%s14 + $0x28] sm:$0xff]
    %v2254 = vld [vmem:[%s14 + $0x30] sm:$0x3]
    %2256 = vset.pattern.permute.xlu0 0
    %2257 = vperm.xlu0 %2256, %v2248
    %v2258 = vpop.permute.xlu0 %2257
    %2261 = vset.pattern.permute.xlu0 0
    %2262 = vperm.xlu0 %2261, %v2249
    %v2263 = vpop.permute.xlu0 %2262
    %2266 = vset.pattern.permute.xlu0 0
    %2267 = vperm.xlu0 %2266, %v2250
    %v2268 = vpop.permute.xlu0 %2267
    %2271 = vset.pattern.permute.xlu0 0
    %2272 = vperm.xlu0 %2271, %v2251
    %v2273 = vpop.permute.xlu0 %2272
    %2276 = vset.pattern.permute.xlu0 0
    %2277 = vperm.xlu0 %2276, %v2252
    %v2278 = vpop.permute.xlu0 %2277
    %2281 = vset.pattern.permute.xlu0 0
    %2282 = vperm.xlu0 %2281, %v2253
    %v2283 = vpop.permute.xlu0 %2282
    %2286 = vset.pattern.permute.xlu0 0
    %2287 = vperm.xlu0 %2286, %v2254
    %v2288 = vpop.permute.xlu0 %2287
    %v2290 = vmul.f32 %v2234, %v2258
    %v2291 = vmul.f32 %v2235, %v2258
    %v2292 = vmul.f32 %v2236, %v2263
    %v2293 = vmul.f32 %v2237, %v2263
    %v2294 = vmul.f32 %v2238, %v2268
    %v2295 = vmul.f32 %v2239, %v2268
    %v2296 = vmul.f32 %v2240, %v2273
    %v2297 = vmul.f32 %v2241, %v2273
    %v2298 = vmul.f32 %v2242, %v2278
    %v2299 = vmul.f32 %v2243, %v2278
    %v2300 = vmul.f32 %v2244, %v2283
    %v2301 = vmul.f32 %v2245, %v2283
    %v2302 = vmul.f32 %v2246, %v2288
    %v2303 = vmul.f32 %v2247, %v2288
    %v2304 = vadd.f32 %v2290, %v2292
    %v2305 = vadd.f32 %v2304, %v2294
    %v2306 = vadd.f32 %v2305, %v2296
    %v2307 = vadd.f32 %v2306, %v2298
    %v2308 = vadd.f32 %v2307, %v2300
    %v2309 = vsel %vm2128, %v2302, 0.0
    %v2310 = vadd.f32 %v2308, %v2309
    %v2311 = vrot.slane %v2310, 4
    %v2312 = vadd.f32 %v2310, %v2311
    %v2313 = vrot.slane %v2312, 2
    %v2314 = vadd.f32 %v2312, %v2313
    %v2315 = vrot.slane %v2314, 1
    %v2316 = vadd.f32 %v2314, %v2315
    %v2317 = vadd.f32 %v2291, %v2293
    %v2318 = vadd.f32 %v2317, %v2295
    %v2319 = vadd.f32 %v2318, %v2297
    %v2320 = vadd.f32 %v2319, %v2299
    %v2321 = vadd.f32 %v2320, %v2301
    %v2322 = vsel %vm2128, %v2303, 0.0
    %v2323 = vadd.f32 %v2321, %v2322
    %v2324 = vrot.slane %v2323, 4
    %v2325 = vadd.f32 %v2323, %v2324
    %v2326 = vrot.slane %v2325, 2
    %v2327 = vadd.f32 %v2325, %v2326
    %v2328 = vrot.slane %v2327, 1
    %v2329 = vadd.f32 %v2327, %v2328
    %v2330 = vld [vmem:[#allocation2] sm:$0x1]
    %2332 = vset.pattern.permute.xlu0 0
    %2333 = vperm.xlu0 %2332, %v2330
    %v2334 = vpop.permute.xlu0 %2333
    %v2336 = vlaneseq
    %v2337 = vshrl.u32 %v2336, 7
    %v2338 = vsub.s32 0, %v2337
    %v2339 = vrot.slane %v2334, %v2338
    %v2340 = vadd.f32 %v2316, %v2339
    %v2341 = vadd.f32 %v2329, %v2339
    %vm2342 = vcmp.gt.f32.partialorder %v2340, 0.0
    %vm2343 = vcmp.gt.f32.partialorder %v2341, 0.0
    %v2344 = vmul.f32 %v2340, 0.01
    %v2345 = vmul.f32 %v2341, 0.01
    %v2346 = vsel %vm2342, %v2340, %v2344
    %v2347 = vsel %vm2343, %v2341, %v2345
    %v2350 = vcombine.low %v2346, %v2347
    %v2352 = vunpack.c.l.s4 1966171168
    %v2353 = vunpack.c.0.s8 %v2352
    %v2354 = vlaneseq
    %v2355 = vshrl.u32 %v2354, 7
    %v2356 = vsub.s32 %v2353, %v2355
    %v2357 = vrot.slane %v2350, %v2356
    %v2359 = vunpack.c.l.s4 1966171168
    %v2360 = vunpack.c.0.s8 %v2359
    %v2361 = vlaneseq
    %v2362 = vshrl.u32 %v2361, 7
    %v2363 = vsub.s32 %v2360, %v2362
    %v2364 = vrot.slane %v2357, %v2363
    %v2366 = vlaneseq
    %vm2367 = vcmp.ge.s32.totalorder %v2366, 0
    %vm2368 = vcmp.lt.s32.totalorder %v2366, 256
    %vm2369 = vmand %vm2367, %vm2368
    %2370 = vst.msk [vmem:[#allocation3] sm:$0x3] %vm2369, %v2364
    %v2371 = vpack.c.bf16 %v725, %v721
    %v2372 = vpack.c.bf16 %v727, %v723
    %v2373 = vpack.c.bf16 %v735, %v731
    %v2374 = vpack.c.bf16 %v737, %v733
    %v2375 = vpack.c.bf16 %v745, %v741
    %v2376 = vpack.c.bf16 %v747, %v743
    %v2377 = vpack.c.bf16 %v755, %v751
    %v2378 = vpack.c.bf16 %v757, %v753
    %v2379 = vpack.c.bf16 %v765, %v761
    %v2380 = vpack.c.bf16 %v767, %v763
    %v2381 = vpack.c.bf16 %v775, %v771
    %v2382 = vpack.c.bf16 %v777, %v773
    %v2383 = vpack.c.bf16 %v785, %v781
    %v2384 = vpack.c.bf16 %v787, %v783
    %v2385 = vpack.c.bf16 %v795, %v791
    %v2386 = vpack.c.bf16 %v797, %v793
    %v2403 = vunpack.c.l.b16 %v2371
    %v2404 = vunpack.c.l.b16 %v2372
    %v2405 = vunpack.c.h.b16 %v2371
    %v2406 = vunpack.c.h.b16 %v2372
    %v2407 = vunpack.c.l.b16 %v2373
    %v2408 = vunpack.c.l.b16 %v2374
    %v2409 = vunpack.c.h.b16 %v2373
    %v2410 = vunpack.c.h.b16 %v2374
    %v2411 = vunpack.c.l.b16 %v2375
    %v2412 = vunpack.c.l.b16 %v2376
    %v2413 = vunpack.c.h.b16 %v2375
    %v2414 = vunpack.c.h.b16 %v2376
    %v2415 = vunpack.c.l.b16 %v2377
    %v2416 = vunpack.c.l.b16 %v2378
    %v2417 = vunpack.c.h.b16 %v2377
    %v2418 = vunpack.c.h.b16 %v2378
    %v2419 = vunpack.c.l.b16 %v2379
    %v2420 = vunpack.c.l.b16 %v2380
    %v2421 = vunpack.c.h.b16 %v2379
    %v2422 = vunpack.c.h.b16 %v2380
    %v2423 = vunpack.c.l.b16 %v2381
    %v2424 = vunpack.c.l.b16 %v2382
    %v2425 = vunpack.c.h.b16 %v2381
    %v2426 = vunpack.c.h.b16 %v2382
    %v2427 = vunpack.c.l.b16 %v2383
    %v2428 = vunpack.c.l.b16 %v2384
    %v2429 = vunpack.c.h.b16 %v2383
    %v2430 = vunpack.c.h.b16 %v2384
    %v2431 = vunpack.c.l.b16 %v2385
    %v2432 = vunpack.c.l.b16 %v2386
    %v2433 = vunpack.c.h.b16 %v2385
    %v2434 = vunpack.c.h.b16 %v2386
    %v2435 = vpack.c.b16 %v2404, %v2403
    %v2436 = vpack.c.b16 %v2406, %v2405
    %v2437 = vpack.c.b16 %v2408, %v2407
    %v2438 = vpack.c.b16 %v2410, %v2409
    %v2439 = vpack.c.b16 %v2412, %v2411
    %v2440 = vpack.c.b16 %v2414, %v2413
    %v2441 = vpack.c.b16 %v2416, %v2415
    %v2442 = vpack.c.b16 %v2418, %v2417
    %v2443 = vpack.c.b16 %v2420, %v2419
    %v2444 = vpack.c.b16 %v2422, %v2421
    %v2445 = vpack.c.b16 %v2424, %v2423
    %v2446 = vpack.c.b16 %v2426, %v2425
    %v2447 = vpack.c.b16 %v2428, %v2427
    %v2448 = vpack.c.b16 %v2430, %v2429
    %v2449 = vpack.c.b16 %v2432, %v2431
    %v2450 = vpack.c.b16 %v2434, %v2433
    %2467 = vst [vmem:[#allocation5] sm:$0xff] %v2435
    %2468 = vst [vmem:[#allocation5 + $0x8] sm:$0xff] %v2436
    %2469 = vst [vmem:[#allocation5 + $0x10] sm:$0xff] %v2437
    %2470 = vst [vmem:[#allocation5 + $0x18] sm:$0xff] %v2438
    %2471 = vst [vmem:[#allocation5 + $0x20] sm:$0xff] %v2439
    %2472 = vst [vmem:[#allocation5 + $0x28] sm:$0xff] %v2440
    %2473 = vst [vmem:[#allocation5 + $0x30] sm:$0xff] %v2441
    %2474 = vst [vmem:[#allocation5 + $0x38] sm:$0xff] %v2442
    %2475 = vst [vmem:[#allocation5 + $0x40] sm:$0xff] %v2443
    %2476 = vst [vmem:[#allocation5 + $0x48] sm:$0xff] %v2444
    %2477 = vst [vmem:[#allocation5 + $0x50] sm:$0xff] %v2445
    %2478 = vst [vmem:[#allocation5 + $0x58] sm:$0xff] %v2446
    %2479 = vst [vmem:[#allocation5 + $0x60] sm:$0xff] %v2447
    %2480 = vst [vmem:[#allocation5 + $0x68] sm:$0xff] %v2448
    %2481 = vst [vmem:[#allocation5 + $0x70] sm:$0xff] %v2449
    %2482 = vst [vmem:[#allocation5 + $0x78] sm:$0xff] %v2450
    %v2483 = vpack.c.bf16 %v805, %v801
    %v2484 = vpack.c.bf16 %v807, %v803
    %v2485 = vpack.c.bf16 %v815, %v811
    %v2486 = vpack.c.bf16 %v817, %v813
    %v2487 = vpack.c.bf16 %v825, %v821
    %v2488 = vpack.c.bf16 %v827, %v823
    %v2489 = vpack.c.bf16 %v835, %v831
    %v2490 = vpack.c.bf16 %v837, %v833
    %v2491 = vpack.c.bf16 %v845, %v841
    %v2492 = vpack.c.bf16 %v847, %v843
    %v2493 = vpack.c.bf16 %v855, %v851
    %v2494 = vpack.c.bf16 %v857, %v853
    %v2495 = vpack.c.bf16 %v865, %v861
    %v2496 = vpack.c.bf16 %v867, %v863
    %v2497 = vpack.c.bf16 %v875, %v871
    %v2498 = vpack.c.bf16 %v877, %v873
    %v2515 = vunpack.c.l.b16 %v2483
    %v2516 = vunpack.c.l.b16 %v2484
    %v2517 = vunpack.c.h.b16 %v2483
    %v2518 = vunpack.c.h.b16 %v2484
    %v2519 = vunpack.c.l.b16 %v2485
    %v2520 = vunpack.c.l.b16 %v2486
    %v2521 = vunpack.c.h.b16 %v2485
    %v2522 = vunpack.c.h.b16 %v2486
    %v2523 = vunpack.c.l.b16 %v2487
    %v2524 = vunpack.c.l.b16 %v2488
    %v2525 = vunpack.c.h.b16 %v2487
    %v2526 = vunpack.c.h.b16 %v2488
    %v2527 = vunpack.c.l.b16 %v2489
    %v2528 = vunpack.c.l.b16 %v2490
    %v2529 = vunpack.c.h.b16 %v2489
    %v2530 = vunpack.c.h.b16 %v2490
    %v2531 = vunpack.c.l.b16 %v2491
    %v2532 = vunpack.c.l.b16 %v2492
    %v2533 = vunpack.c.h.b16 %v2491
    %v2534 = vunpack.c.h.b16 %v2492
    %v2535 = vunpack.c.l.b16 %v2493
    %v2536 = vunpack.c.l.b16 %v2494
    %v2537 = vunpack.c.h.b16 %v2493
    %v2538 = vunpack.c.h.b16 %v2494
    %v2539 = vunpack.c.l.b16 %v2495
    %v2540 = vunpack.c.l.b16 %v2496
    %v2541 = vunpack.c.h.b16 %v2495
    %v2542 = vunpack.c.h.b16 %v2496
    %v2543 = vunpack.c.l.b16 %v2497
    %v2544 = vunpack.c.l.b16 %v2498
    %v2545 = vunpack.c.h.b16 %v2497
    %v2546 = vunpack.c.h.b16 %v2498
    %v2547 = vpack.c.b16 %v2516, %v2515
    %v2548 = vpack.c.b16 %v2518, %v2517
    %v2549 = vpack.c.b16 %v2520, %v2519
    %v2550 = vpack.c.b16 %v2522, %v2521
    %v2551 = vpack.c.b16 %v2524, %v2523
    %v2552 = vpack.c.b16 %v2526, %v2525
    %v2553 = vpack.c.b16 %v2528, %v2527
    %v2554 = vpack.c.b16 %v2530, %v2529
    %v2555 = vpack.c.b16 %v2532, %v2531
    %v2556 = vpack.c.b16 %v2534, %v2533
    %v2557 = vpack.c.b16 %v2536, %v2535
    %v2558 = vpack.c.b16 %v2538, %v2537
    %v2559 = vpack.c.b16 %v2540, %v2539
    %v2560 = vpack.c.b16 %v2542, %v2541
    %v2561 = vpack.c.b16 %v2544, %v2543
    %v2562 = vpack.c.b16 %v2546, %v2545
    %2579 = vst [vmem:[#allocation5 + $0x80] sm:$0xff] %v2547
    %2580 = vst [vmem:[#allocation5 + $0x88] sm:$0xff] %v2548
    %2581 = vst [vmem:[#allocation5 + $0x90] sm:$0xff] %v2549
    %2582 = vst [vmem:[#allocation5 + $0x98] sm:$0xff] %v2550
    %2583 = vst [vmem:[#allocation5 + $0xa0] sm:$0xff] %v2551
    %2584 = vst [vmem:[#allocation5 + $0xa8] sm:$0xff] %v2552
    %2585 = vst [vmem:[#allocation5 + $0xb0] sm:$0xff] %v2553
    %2586 = vst [vmem:[#allocation5 + $0xb8] sm:$0xff] %v2554
    %2587 = vst [vmem:[#allocation5 + $0xc0] sm:$0xff] %v2555
    %2588 = vst [vmem:[#allocation5 + $0xc8] sm:$0xff] %v2556
    %2589 = vst [vmem:[#allocation5 + $0xd0] sm:$0xff] %v2557
    %2590 = vst [vmem:[#allocation5 + $0xd8] sm:$0xff] %v2558
    %2591 = vst [vmem:[#allocation5 + $0xe0] sm:$0xff] %v2559
    %2592 = vst [vmem:[#allocation5 + $0xe8] sm:$0xff] %v2560
    %2593 = vst [vmem:[#allocation5 + $0xf0] sm:$0xff] %v2561
    %2594 = vst [vmem:[#allocation5 + $0xf8] sm:$0xff] %v2562
    %v2611 = vunpack.c.l.b16 %v1096
    %v2612 = vunpack.c.l.b16 %v1097
    %v2613 = vunpack.c.h.b16 %v1096
    %v2614 = vunpack.c.h.b16 %v1097
    %v2615 = vunpack.c.l.b16 %v1098
    %v2616 = vunpack.c.l.b16 %v1099
    %v2617 = vunpack.c.h.b16 %v1098
    %v2618 = vunpack.c.h.b16 %v1099
    %v2619 = vunpack.c.l.b16 %v1100
    %v2620 = vunpack.c.l.b16 %v1101
    %v2621 = vunpack.c.h.b16 %v1100
    %v2622 = vunpack.c.h.b16 %v1101
    %v2623 = vunpack.c.l.b16 %v1102
    %v2624 = vunpack.c.l.b16 %v1103
    %v2625 = vunpack.c.h.b16 %v1102
    %v2626 = vunpack.c.h.b16 %v1103
    %v2627 = vunpack.c.l.b16 %v1104
    %v2628 = vunpack.c.l.b16 %v1105
    %v2629 = vunpack.c.h.b16 %v1104
    %v2630 = vunpack.c.h.b16 %v1105
    %v2631 = vunpack.c.l.b16 %v1106
    %v2632 = vunpack.c.l.b16 %v1107
    %v2633 = vunpack.c.h.b16 %v1106
    %v2634 = vunpack.c.h.b16 %v1107
    %v2635 = vunpack.c.l.b16 %v1108
    %v2636 = vunpack.c.l.b16 %v1109
    %v2637 = vunpack.c.h.b16 %v1108
    %v2638 = vunpack.c.h.b16 %v1109
    %v2639 = vunpack.c.l.b16 %v1110
    %v2640 = vunpack.c.l.b16 %v1111
    %v2641 = vunpack.c.h.b16 %v1110
    %v2642 = vunpack.c.h.b16 %v1111
    %v2643 = vpack.c.b16 %v2612, %v2611
    %v2644 = vpack.c.b16 %v2614, %v2613
    %v2645 = vpack.c.b16 %v2616, %v2615
    %v2646 = vpack.c.b16 %v2618, %v2617
    %v2647 = vpack.c.b16 %v2620, %v2619
    %v2648 = vpack.c.b16 %v2622, %v2621
    %v2649 = vpack.c.b16 %v2624, %v2623
    %v2650 = vpack.c.b16 %v2626, %v2625
    %v2651 = vpack.c.b16 %v2628, %v2627
    %v2652 = vpack.c.b16 %v2630, %v2629
    %v2653 = vpack.c.b16 %v2632, %v2631
    %v2654 = vpack.c.b16 %v2634, %v2633
    %v2655 = vpack.c.b16 %v2636, %v2635
    %v2656 = vpack.c.b16 %v2638, %v2637
    %v2657 = vpack.c.b16 %v2640, %v2639
    %v2658 = vpack.c.b16 %v2642, %v2641
    %2675 = vst [vmem:[#allocation5 + $0x100] sm:$0xff] %v2643
    %2676 = vst [vmem:[#allocation5 + $0x108] sm:$0xff] %v2644
    %2677 = vst [vmem:[#allocation5 + $0x110] sm:$0xff] %v2645
    %2678 = vst [vmem:[#allocation5 + $0x118] sm:$0xff] %v2646
    %2679 = vst [vmem:[#allocation5 + $0x120] sm:$0xff] %v2647
    %2680 = vst [vmem:[#allocation5 + $0x128] sm:$0xff] %v2648
    %2681 = vst [vmem:[#allocation5 + $0x130] sm:$0xff] %v2649
    %2682 = vst [vmem:[#allocation5 + $0x138] sm:$0xff] %v2650
    %2683 = vst [vmem:[#allocation5 + $0x140] sm:$0xff] %v2651
    %2684 = vst [vmem:[#allocation5 + $0x148] sm:$0xff] %v2652
    %2685 = vst [vmem:[#allocation5 + $0x150] sm:$0xff] %v2653
    %2686 = vst [vmem:[#allocation5 + $0x158] sm:$0xff] %v2654
    %2687 = vst [vmem:[#allocation5 + $0x160] sm:$0xff] %v2655
    %2688 = vst [vmem:[#allocation5 + $0x168] sm:$0xff] %v2656
    %2689 = vst [vmem:[#allocation5 + $0x170] sm:$0xff] %v2657
    %2690 = vst [vmem:[#allocation5 + $0x178] sm:$0xff] %v2658
    // Predicated region
    $region66: #{tpu_custom_call.1} parent=1 // pred_check
      _
    $region67: #{tpu_custom_call.1} parent=1 // pred_check_branch
      %2692 = sbr.rel (0) target = $region69
    $region68: #{tpu_custom_call.1} parent=1 // pred_region
      %s2694 = ssub.s32 32, 32
      %2695 = vsyncadd [#allocation4], %s2694
      %s2697 = sshll.u32 [#allocation3], 4
      %s2698 = int_to_ptr.vmem [resolvable:$true] %s2697
      %2700 = dma.vmem_to_hbm [thread:$0]  %s2698, 32, %s16, [#allocation4]
    $region69: #{tpu_custom_call.1} parent=1 // pred_fallthru
      _
    // Predicated region
    $region70: #{tpu_custom_call.1} parent=1 // pred_check
      _
    $region71: #{tpu_custom_call.1} parent=1 // pred_check_branch
      %2702 = sbr.rel (0) target = $region73
    $region72: #{tpu_custom_call.1} parent=1 // pred_region
      %s2704 = ssub.s32 6144, 6144
      %2705 = vsyncadd [#allocation6], %s2704
      %s2706 = sshll.u32 [#allocation5], 4
      %s2707 = int_to_ptr.vmem [resolvable:$true] %s2706
      %2712 = dma.vmem_to_hbm [thread:$0]  %s2707, 6144, %s17, [#allocation6], 128, 128, 8
    $region73: #{tpu_custom_call.1} parent=1 // pred_fallthru
      _
    // Predicated region
    $region74: #{tpu_custom_call.1} parent=1 // pred_check
      _
    $region75: #{tpu_custom_call.1} parent=1 // pred_check_branch
      %2714 = sbr.rel (0) target = $region77
    $region76: #{tpu_custom_call.1} parent=1 // pred_region
      %2715 = dma.done [#allocation4], 32
    $region77: #{tpu_custom_call.1} parent=1 // pred_fallthru
      _
    // Predicated region
    $region78: #{tpu_custom_call.1} parent=1 // pred_check
      _
    $region79: #{tpu_custom_call.1} parent=1 // pred_check_branch
      %2717 = sbr.rel (0) target = $region81
    $region80: #{tpu_custom_call.1} parent=1 // pred_region
      %2718 = dma.done [#allocation6], 6144
    $region81: #{tpu_custom_call.1} parent=1 // pred_fallthru
      _
    %2719 = vsyncpa [#allocation4], 1
    %2720 = vsyncpa [#allocation6], 1

</llo_original>
